<compile_context>
chip_gen: v5e
topology: v5e:2x2
jax: 0.10.0
libtpu: 0.0.40
codegen_flags: <defaults>
</compile_context>

<pallas_src>
import functools

import jax
import jax.numpy as jnp
from jax.experimental import pallas as pl
from jax.experimental.pallas import tpu as pltpu


def _round_up(x, m):
    return ((x + m - 1) // m) * m


def _vmem_capacity_bytes():
    """Trace-time VMEM capacity query with a conservative fallback (v7x per-TC)."""
    try:
        return int(pltpu.get_tpu_info().vmem_capacity_bytes)
    except Exception:
        return 64 << 20


def _gather_rows_kernel(idx_ref, table_ref, out_ref, sem, *, rows_per_tile, vocab_size):
    """Gather `rows_per_tile` rows of `table_ref` into the current output tile.

    idx_ref:   (N_pad,) int32   SMEM  (scalar-prefetched row ids)
    table_ref: (V, D)   float32 either HBM-resident (pl.ANY) or a VMEM-resident block
    out_ref:   (TN, D)  float32 VMEM  (current output tile)
    sem:       single DMA semaphore shared by all per-row copies of this tile
    """
    base = pl.multiple_of(pl.program_id(0) * rows_per_tile, rows_per_tile)

    # Issue phase -- fully unrolled at trace time so index read, clamp and
    # descriptor setup co-issue. Rows are clamped in-kernel (scalar min/max is
    # free in the issue loop; torch would raise on an out-of-range id).
    for r in range(rows_per_tile):
        row = jnp.minimum(jnp.maximum(idx_ref[base + r], 0), vocab_size - 1)
        pltpu.make_async_copy(
            table_ref.at[pl.ds(row, 1), :],
            out_ref.at[pl.ds(r, 1), :],
            sem,
        ).start()

    # Drain phase -- ONE tile-sized wait retires every per-row copy at once:
    # all copies share `sem` and their sizes sum to exactly out_ref's bytes.
    pltpu.make_async_copy(out_ref, out_ref, sem).wait()


def embedding_lookup(indices_flat, table, *, rows_per_tile=256):
    """indices_flat: (N,) int -> (N, D) gathered rows of `table` ((V, D) float32)."""
    n = indices_flat.shape[0]
    v, d = table.shape
    itemsize = jnp.dtype(table.dtype).itemsize

    tn = min(rows_per_tile, _round_up(n, 8))       # rows gathered per grid step
    n_pad = _round_up(n, tn)

    idx = indices_flat.astype(jnp.int32)
    if n_pad != n:
        # Padded tail rows gather (clamped) row 0 and are sliced off below.
        idx = jnp.pad(idx, (0, n_pad - n))

    # --- VMEM-resident fast path vs HBM gather fallback -------------------
    table_bytes = v * d * itemsize
    vmem_cap = _vmem_capacity_bytes()
    resident = table_bytes <= vmem_cap // 4        # leaves room for 2x table buffering
                                                   # + pipelined output tiles on v7x/v6e/v5e
    if resident:
        # Same block index every step => the table is DMA'd HBM->VMEM once and
        # stays resident; the per-row copies become local VMEM->VMEM DMAs.
        table_spec = pl.BlockSpec((v, d), lambda i, idx_ref: (0, 0))
        vmem_limit = int(2 * table_bytes + 4 * tn * d * itemsize + (2 << 20))
        vmem_limit = min(max(vmem_limit, 16 << 20), int(vmem_cap * 0.9))
    else:
        table_spec = pl.BlockSpec(memory_space=pl.ANY)   # table stays in HBM
        vmem_limit = None

    kernel = functools.partial(_gather_rows_kernel, rows_per_tile=tn, vocab_size=v)
    bytes_accessed = int(2 * n_pad * d * itemsize + 4 * n_pad
                         + (table_bytes if resident else n_pad * d * itemsize))

    out = pl.pallas_call(
        kernel,
        out_shape=jax.ShapeDtypeStruct((n_pad, d), table.dtype),
        grid_spec=pltpu.PrefetchScalarGridSpec(
            num_scalar_prefetch=1,                             # idx -> SMEM
            grid=(n_pad // tn,),
            in_specs=[table_spec],
            out_specs=pl.BlockSpec((tn, d), lambda i, idx_ref: (i, 0)),
            scratch_shapes=[pltpu.SemaphoreType.DMA(())],
        ),
        compiler_params=pltpu.CompilerParams(
            dimension_semantics=("parallel",),                 # megacore on v7x
            vmem_limit_bytes=vmem_limit),
        cost_estimate=pl.CostEstimate(
            flops=0, transcendentals=0, bytes_accessed=bytes_accessed),
    )(idx, table)
    return out[:n] if n_pad != n else out


class EmbeddingsPallas:
    """JAX/Pallas port of onmt Embeddings (feat_merge='concat' path).

    In the reference module `make_embedding` only contains `emb_luts`, so
    forward() is exactly "per-feature lookup, then concat along dim 2";
    feat_merge only changes `embedding_size`.
    """

    def __init__(self, word_vec_size, word_vocab_size, word_padding_idx,
                 feat_merge='concat', feat_vec_exponent=0.7,
                 feat_padding_idx=None, feat_vocab_sizes=None,
                 key=jax.random.PRNGKey(0)):
        if feat_padding_idx is None:
            feat_padding_idx = []
        if feat_vocab_sizes is None:
            feat_vocab_sizes = []

        vocab_sizes = [word_vocab_size] + list(feat_vocab_sizes)
        feat_dims = [int(v ** feat_vec_exponent) for v in feat_vocab_sizes]
        emb_dims = [word_vec_size] + feat_dims
        pad_indices = [word_padding_idx] + list(feat_padding_idx)

        # nn.Embedding default init ~ N(0, 1); padding row is zeroed.
        self.tables = []
        for i, (vsz, dim, pad) in enumerate(zip(vocab_sizes, emb_dims, pad_indices)):
            k = jax.random.fold_in(key, i)
            w = jax.random.normal(k, (vsz, dim), dtype=jnp.float32)
            w = w.at[pad].set(0.0)
            self.tables.append(w)

        self.word_padding_idx = word_padding_idx
        self.word_vec_size = word_vec_size
        self.embedding_size = (sum(emb_dims) if feat_merge == 'concat'
                               else word_vec_size)

    def __call__(self, source, step=None):
        """source: (len, batch, nfeat) int32 -> (len, batch, embedding_size) f32."""
        L, B, F = source.shape
        assert F == len(self.tables)

        # Word table (large): Pallas DMA-gather hot path.
        word_idx = source[:, :, 0].reshape(L * B)
        outs = [embedding_lookup(word_idx, self.tables[0]).reshape(L, B, -1)]

        # Tiny feature tables: plain XLA gather (a Pallas launch is pure
        # overhead at this size).
        for f in range(1, F):
            outs.append(jnp.take(self.tables[f], source[:, :, f], axis=0))

        return jnp.concatenate(outs, axis=2)   # torch.cat(..., 2)


if __name__ == "__main__":
    key = jax.random.PRNGKey(0)

    # Small shapes consistent with the module's forward:
    #   source: (len=8, batch=2, nfeat=2)  (word feature + 1 sparse feature)
    word_vocab_size = 50
    word_vec_size = 128          # lane-dense word embedding (>=128 lanes)
    word_padding_idx = 1
    feat_vocab_sizes = [10]      # feature dim = int(10**0.7) = 5
    feat_padding_idx = [0]

    model = EmbeddingsPallas(
        word_vec_size=word_vec_size,
        word_vocab_size=word_vocab_size,
        word_padding_idx=word_padding_idx,
        feat_merge='concat',
        feat_vec_exponent=0.7,
        feat_padding_idx=feat_padding_idx,
        feat_vocab_sizes=feat_vocab_sizes,
        key=jax.random.fold_in(key, 100),
    )

    L, B = 8, 2
    k_w, k_f = jax.random.split(jax.random.fold_in(key, 200))
    word_ids = jax.random.randint(k_w, (L, B, 1), 0, word_vocab_size, dtype=jnp.int32)
    feat_ids = jax.random.randint(k_f, (L, B, 1), 0, feat_vocab_sizes[0], dtype=jnp.int32)
    source = jnp.concatenate([word_ids, feat_ids], axis=2)   # (len, batch, nfeat)

    out = model(source)
    out = jax.block_until_ready(out)

    # Correctness check against pure-JAX reference (jnp.take gather + concat).
    ref = jnp.concatenate(
        [jnp.take(model.tables[f], source[:, :, f], axis=0) for f in range(2)],
        axis=2)
    assert out.shape == (L, B, model.embedding_size), out.shape
    assert jnp.allclose(out, ref, atol=1e-6), "mismatch vs reference gather"

    print("KERNEL_OK")
</pallas_src>

<mosaic_0001>
module attributes {stable_mosaic.version = 11 : i64} {
  func.func @_gather_rows_kernel(%arg0: i32, %arg1: memref<16xi32, #tpu.memory_space<smem>>, %arg2: memref<50x128xf32, #tpu.memory_space<vmem>>, %arg3: memref<16x128xf32, #tpu.memory_space<vmem>>, %arg4: memref<!tpu.dma_semaphore, #tpu.memory_space<semaphore_mem>>) attributes {dimension_semantics = [#tpu.dimension_semantics<parallel>], iteration_bounds = array<i64: 1>, scalar_prefetch = 1 : i64, scratch_operands = 1 : i64, tpu.core_type = #tpu.core_type<tc>, window_params = [{pipeline_mode = #tpu.pipeline_mode<synchronous>, transform_indices = @transform_0, window_bounds = array<i64: 50, 128>}, {transform_indices = @transform_1, window_bounds = array<i64: 16, 128>}]} {
    %c16_i32 = arith.constant 16 : i32
    %0 = arith.muli %arg0, %c16_i32 : i32
    %1 = tpu.assume_multiple %0, 16 : i32
    %c0_i32 = arith.constant 0 : i32
    %2 = arith.addi %1, %c0_i32 : i32
    %3 = arith.index_cast %2 : i32 to index
    %4 = memref.load %arg1[%3] : memref<16xi32, #tpu.memory_space<smem>>
    %c0_i32_0 = arith.constant 0 : i32
    %5 = arith.maxsi %4, %c0_i32_0 : i32
    %c49_i32 = arith.constant 49 : i32
    %6 = arith.minsi %5, %c49_i32 : i32
    %c0_i32_1 = arith.constant 0 : i32
    %7 = tpu.memref_slice %arg2[%6, %c0_i32_1] : memref<50x128xf32, #tpu.memory_space<vmem>> -> memref<1x128xf32, #tpu.memory_space<vmem>>
    %c0_i32_2 = arith.constant 0 : i32
    %c0_i32_3 = arith.constant 0 : i32
    %8 = tpu.memref_slice %arg3[%c0_i32_2, %c0_i32_3] : memref<16x128xf32, #tpu.memory_space<vmem>> -> memref<1x128xf32, #tpu.memory_space<vmem>>
    tpu.enqueue_dma source(%7 : memref<1x128xf32, #tpu.memory_space<vmem>>) target(%8 : memref<1x128xf32, #tpu.memory_space<vmem>>) target_semaphore(%arg4 : memref<!tpu.dma_semaphore, #tpu.memory_space<semaphore_mem>>)
    %c1_i32 = arith.constant 1 : i32
    %9 = arith.addi %1, %c1_i32 : i32
    %10 = arith.index_cast %9 : i32 to index
    %11 = memref.load %arg1[%10] : memref<16xi32, #tpu.memory_space<smem>>
    %c0_i32_4 = arith.constant 0 : i32
    %12 = arith.maxsi %11, %c0_i32_4 : i32
    %c49_i32_5 = arith.constant 49 : i32
    %13 = arith.minsi %12, %c49_i32_5 : i32
    %c0_i32_6 = arith.constant 0 : i32
    %14 = tpu.memref_slice %arg2[%13, %c0_i32_6] : memref<50x128xf32, #tpu.memory_space<vmem>> -> memref<1x128xf32, #tpu.memory_space<vmem>>
    %c1_i32_7 = arith.constant 1 : i32
    %c0_i32_8 = arith.constant 0 : i32
    %15 = tpu.memref_slice %arg3[%c1_i32_7, %c0_i32_8] : memref<16x128xf32, #tpu.memory_space<vmem>> -> memref<1x128xf32, #tpu.memory_space<vmem>>
    tpu.enqueue_dma source(%14 : memref<1x128xf32, #tpu.memory_space<vmem>>) target(%15 : memref<1x128xf32, #tpu.memory_space<vmem>>) target_semaphore(%arg4 : memref<!tpu.dma_semaphore, #tpu.memory_space<semaphore_mem>>)
    %c2_i32 = arith.constant 2 : i32
    %16 = arith.addi %1, %c2_i32 : i32
    %17 = arith.index_cast %16 : i32 to index
    %18 = memref.load %arg1[%17] : memref<16xi32, #tpu.memory_space<smem>>
    %c0_i32_9 = arith.constant 0 : i32
    %19 = arith.maxsi %18, %c0_i32_9 : i32
    %c49_i32_10 = arith.constant 49 : i32
    %20 = arith.minsi %19, %c49_i32_10 : i32
    %c0_i32_11 = arith.constant 0 : i32
    %21 = tpu.memref_slice %arg2[%20, %c0_i32_11] : memref<50x128xf32, #tpu.memory_space<vmem>> -> memref<1x128xf32, #tpu.memory_space<vmem>>
    %c2_i32_12 = arith.constant 2 : i32
    %c0_i32_13 = arith.constant 0 : i32
    %22 = tpu.memref_slice %arg3[%c2_i32_12, %c0_i32_13] : memref<16x128xf32, #tpu.memory_space<vmem>> -> memref<1x128xf32, #tpu.memory_space<vmem>>
    tpu.enqueue_dma source(%21 : memref<1x128xf32, #tpu.memory_space<vmem>>) target(%22 : memref<1x128xf32, #tpu.memory_space<vmem>>) target_semaphore(%arg4 : memref<!tpu.dma_semaphore, #tpu.memory_space<semaphore_mem>>)
    %c3_i32 = arith.constant 3 : i32
    %23 = arith.addi %1, %c3_i32 : i32
    %24 = arith.index_cast %23 : i32 to index
    %25 = memref.load %arg1[%24] : memref<16xi32, #tpu.memory_space<smem>>
    %c0_i32_14 = arith.constant 0 : i32
    %26 = arith.maxsi %25, %c0_i32_14 : i32
    %c49_i32_15 = arith.constant 49 : i32
    %27 = arith.minsi %26, %c49_i32_15 : i32
    %c0_i32_16 = arith.constant 0 : i32
    %28 = tpu.memref_slice %arg2[%27, %c0_i32_16] : memref<50x128xf32, #tpu.memory_space<vmem>> -> memref<1x128xf32, #tpu.memory_space<vmem>>
    %c3_i32_17 = arith.constant 3 : i32
    %c0_i32_18 = arith.constant 0 : i32
    %29 = tpu.memref_slice %arg3[%c3_i32_17, %c0_i32_18] : memref<16x128xf32, #tpu.memory_space<vmem>> -> memref<1x128xf32, #tpu.memory_space<vmem>>
    tpu.enqueue_dma source(%28 : memref<1x128xf32, #tpu.memory_space<vmem>>) target(%29 : memref<1x128xf32, #tpu.memory_space<vmem>>) target_semaphore(%arg4 : memref<!tpu.dma_semaphore, #tpu.memory_space<semaphore_mem>>)
    %c4_i32 = arith.constant 4 : i32
    %30 = arith.addi %1, %c4_i32 : i32
    %31 = arith.index_cast %30 : i32 to index
    %32 = memref.load %arg1[%31] : memref<16xi32, #tpu.memory_space<smem>>
    %c0_i32_19 = arith.constant 0 : i32
    %33 = arith.maxsi %32, %c0_i32_19 : i32
    %c49_i32_20 = arith.constant 49 : i32
    %34 = arith.minsi %33, %c49_i32_20 : i32
    %c0_i32_21 = arith.constant 0 : i32
    %35 = tpu.memref_slice %arg2[%34, %c0_i32_21] : memref<50x128xf32, #tpu.memory_space<vmem>> -> memref<1x128xf32, #tpu.memory_space<vmem>>
    %c4_i32_22 = arith.constant 4 : i32
    %c0_i32_23 = arith.constant 0 : i32
    %36 = tpu.memref_slice %arg3[%c4_i32_22, %c0_i32_23] : memref<16x128xf32, #tpu.memory_space<vmem>> -> memref<1x128xf32, #tpu.memory_space<vmem>>
    tpu.enqueue_dma source(%35 : memref<1x128xf32, #tpu.memory_space<vmem>>) target(%36 : memref<1x128xf32, #tpu.memory_space<vmem>>) target_semaphore(%arg4 : memref<!tpu.dma_semaphore, #tpu.memory_space<semaphore_mem>>)
    %c5_i32 = arith.constant 5 : i32
    %37 = arith.addi %1, %c5_i32 : i32
    %38 = arith.index_cast %37 : i32 to index
    %39 = memref.load %arg1[%38] : memref<16xi32, #tpu.memory_space<smem>>
    %c0_i32_24 = arith.constant 0 : i32
    %40 = arith.maxsi %39, %c0_i32_24 : i32
    %c49_i32_25 = arith.constant 49 : i32
    %41 = arith.minsi %40, %c49_i32_25 : i32
    %c0_i32_26 = arith.constant 0 : i32
    %42 = tpu.memref_slice %arg2[%41, %c0_i32_26] : memref<50x128xf32, #tpu.memory_space<vmem>> -> memref<1x128xf32, #tpu.memory_space<vmem>>
    %c5_i32_27 = arith.constant 5 : i32
    %c0_i32_28 = arith.constant 0 : i32
    %43 = tpu.memref_slice %arg3[%c5_i32_27, %c0_i32_28] : memref<16x128xf32, #tpu.memory_space<vmem>> -> memref<1x128xf32, #tpu.memory_space<vmem>>
    tpu.enqueue_dma source(%42 : memref<1x128xf32, #tpu.memory_space<vmem>>) target(%43 : memref<1x128xf32, #tpu.memory_space<vmem>>) target_semaphore(%arg4 : memref<!tpu.dma_semaphore, #tpu.memory_space<semaphore_mem>>)
    %c6_i32 = arith.constant 6 : i32
    %44 = arith.addi %1, %c6_i32 : i32
    %45 = arith.index_cast %44 : i32 to index
    %46 = memref.load %arg1[%45] : memref<16xi32, #tpu.memory_space<smem>>
    %c0_i32_29 = arith.constant 0 : i32
    %47 = arith.maxsi %46, %c0_i32_29 : i32
    %c49_i32_30 = arith.constant 49 : i32
    %48 = arith.minsi %47, %c49_i32_30 : i32
    %c0_i32_31 = arith.constant 0 : i32
    %49 = tpu.memref_slice %arg2[%48, %c0_i32_31] : memref<50x128xf32, #tpu.memory_space<vmem>> -> memref<1x128xf32, #tpu.memory_space<vmem>>
    %c6_i32_32 = arith.constant 6 : i32
    %c0_i32_33 = arith.constant 0 : i32
    %50 = tpu.memref_slice %arg3[%c6_i32_32, %c0_i32_33] : memref<16x128xf32, #tpu.memory_space<vmem>> -> memref<1x128xf32, #tpu.memory_space<vmem>>
    tpu.enqueue_dma source(%49 : memref<1x128xf32, #tpu.memory_space<vmem>>) target(%50 : memref<1x128xf32, #tpu.memory_space<vmem>>) target_semaphore(%arg4 : memref<!tpu.dma_semaphore, #tpu.memory_space<semaphore_mem>>)
    %c7_i32 = arith.constant 7 : i32
    %51 = arith.addi %1, %c7_i32 : i32
    %52 = arith.index_cast %51 : i32 to index
    %53 = memref.load %arg1[%52] : memref<16xi32, #tpu.memory_space<smem>>
    %c0_i32_34 = arith.constant 0 : i32
    %54 = arith.maxsi %53, %c0_i32_34 : i32
    %c49_i32_35 = arith.constant 49 : i32
    %55 = arith.minsi %54, %c49_i32_35 : i32
    %c0_i32_36 = arith.constant 0 : i32
    %56 = tpu.memref_slice %arg2[%55, %c0_i32_36] : memref<50x128xf32, #tpu.memory_space<vmem>> -> memref<1x128xf32, #tpu.memory_space<vmem>>
    %c7_i32_37 = arith.constant 7 : i32
    %c0_i32_38 = arith.constant 0 : i32
    %57 = tpu.memref_slice %arg3[%c7_i32_37, %c0_i32_38] : memref<16x128xf32, #tpu.memory_space<vmem>> -> memref<1x128xf32, #tpu.memory_space<vmem>>
    tpu.enqueue_dma source(%56 : memref<1x128xf32, #tpu.memory_space<vmem>>) target(%57 : memref<1x128xf32, #tpu.memory_space<vmem>>) target_semaphore(%arg4 : memref<!tpu.dma_semaphore, #tpu.memory_space<semaphore_mem>>)
    %c8_i32 = arith.constant 8 : i32
    %58 = arith.addi %1, %c8_i32 : i32
    %59 = arith.index_cast %58 : i32 to index
    %60 = memref.load %arg1[%59] : memref<16xi32, #tpu.memory_space<smem>>
    %c0_i32_39 = arith.constant 0 : i32
    %61 = arith.maxsi %60, %c0_i32_39 : i32
    %c49_i32_40 = arith.constant 49 : i32
    %62 = arith.minsi %61, %c49_i32_40 : i32
    %c0_i32_41 = arith.constant 0 : i32
    %63 = tpu.memref_slice %arg2[%62, %c0_i32_41] : memref<50x128xf32, #tpu.memory_space<vmem>> -> memref<1x128xf32, #tpu.memory_space<vmem>>
    %c8_i32_42 = arith.constant 8 : i32
    %c0_i32_43 = arith.constant 0 : i32
    %64 = tpu.memref_slice %arg3[%c8_i32_42, %c0_i32_43] : memref<16x128xf32, #tpu.memory_space<vmem>> -> memref<1x128xf32, #tpu.memory_space<vmem>>
    tpu.enqueue_dma source(%63 : memref<1x128xf32, #tpu.memory_space<vmem>>) target(%64 : memref<1x128xf32, #tpu.memory_space<vmem>>) target_semaphore(%arg4 : memref<!tpu.dma_semaphore, #tpu.memory_space<semaphore_mem>>)
    %c9_i32 = arith.constant 9 : i32
    %65 = arith.addi %1, %c9_i32 : i32
    %66 = arith.index_cast %65 : i32 to index
    %67 = memref.load %arg1[%66] : memref<16xi32, #tpu.memory_space<smem>>
    %c0_i32_44 = arith.constant 0 : i32
    %68 = arith.maxsi %67, %c0_i32_44 : i32
    %c49_i32_45 = arith.constant 49 : i32
    %69 = arith.minsi %68, %c49_i32_45 : i32
    %c0_i32_46 = arith.constant 0 : i32
    %70 = tpu.memref_slice %arg2[%69, %c0_i32_46] : memref<50x128xf32, #tpu.memory_space<vmem>> -> memref<1x128xf32, #tpu.memory_space<vmem>>
    %c9_i32_47 = arith.constant 9 : i32
    %c0_i32_48 = arith.constant 0 : i32
    %71 = tpu.memref_slice %arg3[%c9_i32_47, %c0_i32_48] : memref<16x128xf32, #tpu.memory_space<vmem>> -> memref<1x128xf32, #tpu.memory_space<vmem>>
    tpu.enqueue_dma source(%70 : memref<1x128xf32, #tpu.memory_space<vmem>>) target(%71 : memref<1x128xf32, #tpu.memory_space<vmem>>) target_semaphore(%arg4 : memref<!tpu.dma_semaphore, #tpu.memory_space<semaphore_mem>>)
    %c10_i32 = arith.constant 10 : i32
    %72 = arith.addi %1, %c10_i32 : i32
    %73 = arith.index_cast %72 : i32 to index
    %74 = memref.load %arg1[%73] : memref<16xi32, #tpu.memory_space<smem>>
    %c0_i32_49 = arith.constant 0 : i32
    %75 = arith.maxsi %74, %c0_i32_49 : i32
    %c49_i32_50 = arith.constant 49 : i32
    %76 = arith.minsi %75, %c49_i32_50 : i32
    %c0_i32_51 = arith.constant 0 : i32
    %77 = tpu.memref_slice %arg2[%76, %c0_i32_51] : memref<50x128xf32, #tpu.memory_space<vmem>> -> memref<1x128xf32, #tpu.memory_space<vmem>>
    %c10_i32_52 = arith.constant 10 : i32
    %c0_i32_53 = arith.constant 0 : i32
    %78 = tpu.memref_slice %arg3[%c10_i32_52, %c0_i32_53] : memref<16x128xf32, #tpu.memory_space<vmem>> -> memref<1x128xf32, #tpu.memory_space<vmem>>
    tpu.enqueue_dma source(%77 : memref<1x128xf32, #tpu.memory_space<vmem>>) target(%78 : memref<1x128xf32, #tpu.memory_space<vmem>>) target_semaphore(%arg4 : memref<!tpu.dma_semaphore, #tpu.memory_space<semaphore_mem>>)
    %c11_i32 = arith.constant 11 : i32
    %79 = arith.addi %1, %c11_i32 : i32
    %80 = arith.index_cast %79 : i32 to index
    %81 = memref.load %arg1[%80] : memref<16xi32, #tpu.memory_space<smem>>
    %c0_i32_54 = arith.constant 0 : i32
    %82 = arith.maxsi %81, %c0_i32_54 : i32
    %c49_i32_55 = arith.constant 49 : i32
    %83 = arith.minsi %82, %c49_i32_55 : i32
    %c0_i32_56 = arith.constant 0 : i32
    %84 = tpu.memref_slice %arg2[%83, %c0_i32_56] : memref<50x128xf32, #tpu.memory_space<vmem>> -> memref<1x128xf32, #tpu.memory_space<vmem>>
    %c11_i32_57 = arith.constant 11 : i32
    %c0_i32_58 = arith.constant 0 : i32
    %85 = tpu.memref_slice %arg3[%c11_i32_57, %c0_i32_58] : memref<16x128xf32, #tpu.memory_space<vmem>> -> memref<1x128xf32, #tpu.memory_space<vmem>>
    tpu.enqueue_dma source(%84 : memref<1x128xf32, #tpu.memory_space<vmem>>) target(%85 : memref<1x128xf32, #tpu.memory_space<vmem>>) target_semaphore(%arg4 : memref<!tpu.dma_semaphore, #tpu.memory_space<semaphore_mem>>)
    %c12_i32 = arith.constant 12 : i32
    %86 = arith.addi %1, %c12_i32 : i32
    %87 = arith.index_cast %86 : i32 to index
    %88 = memref.load %arg1[%87] : memref<16xi32, #tpu.memory_space<smem>>
    %c0_i32_59 = arith.constant 0 : i32
    %89 = arith.maxsi %88, %c0_i32_59 : i32
    %c49_i32_60 = arith.constant 49 : i32
    %90 = arith.minsi %89, %c49_i32_60 : i32
    %c0_i32_61 = arith.constant 0 : i32
    %91 = tpu.memref_slice %arg2[%90, %c0_i32_61] : memref<50x128xf32, #tpu.memory_space<vmem>> -> memref<1x128xf32, #tpu.memory_space<vmem>>
    %c12_i32_62 = arith.constant 12 : i32
    %c0_i32_63 = arith.constant 0 : i32
    %92 = tpu.memref_slice %arg3[%c12_i32_62, %c0_i32_63] : memref<16x128xf32, #tpu.memory_space<vmem>> -> memref<1x128xf32, #tpu.memory_space<vmem>>
    tpu.enqueue_dma source(%91 : memref<1x128xf32, #tpu.memory_space<vmem>>) target(%92 : memref<1x128xf32, #tpu.memory_space<vmem>>) target_semaphore(%arg4 : memref<!tpu.dma_semaphore, #tpu.memory_space<semaphore_mem>>)
    %c13_i32 = arith.constant 13 : i32
    %93 = arith.addi %1, %c13_i32 : i32
    %94 = arith.index_cast %93 : i32 to index
    %95 = memref.load %arg1[%94] : memref<16xi32, #tpu.memory_space<smem>>
    %c0_i32_64 = arith.constant 0 : i32
    %96 = arith.maxsi %95, %c0_i32_64 : i32
    %c49_i32_65 = arith.constant 49 : i32
    %97 = arith.minsi %96, %c49_i32_65 : i32
    %c0_i32_66 = arith.constant 0 : i32
    %98 = tpu.memref_slice %arg2[%97, %c0_i32_66] : memref<50x128xf32, #tpu.memory_space<vmem>> -> memref<1x128xf32, #tpu.memory_space<vmem>>
    %c13_i32_67 = arith.constant 13 : i32
    %c0_i32_68 = arith.constant 0 : i32
    %99 = tpu.memref_slice %arg3[%c13_i32_67, %c0_i32_68] : memref<16x128xf32, #tpu.memory_space<vmem>> -> memref<1x128xf32, #tpu.memory_space<vmem>>
    tpu.enqueue_dma source(%98 : memref<1x128xf32, #tpu.memory_space<vmem>>) target(%99 : memref<1x128xf32, #tpu.memory_space<vmem>>) target_semaphore(%arg4 : memref<!tpu.dma_semaphore, #tpu.memory_space<semaphore_mem>>)
    %c14_i32 = arith.constant 14 : i32
    %100 = arith.addi %1, %c14_i32 : i32
    %101 = arith.index_cast %100 : i32 to index
    %102 = memref.load %arg1[%101] : memref<16xi32, #tpu.memory_space<smem>>
    %c0_i32_69 = arith.constant 0 : i32
    %103 = arith.maxsi %102, %c0_i32_69 : i32
    %c49_i32_70 = arith.constant 49 : i32
    %104 = arith.minsi %103, %c49_i32_70 : i32
    %c0_i32_71 = arith.constant 0 : i32
    %105 = tpu.memref_slice %arg2[%104, %c0_i32_71] : memref<50x128xf32, #tpu.memory_space<vmem>> -> memref<1x128xf32, #tpu.memory_space<vmem>>
    %c14_i32_72 = arith.constant 14 : i32
    %c0_i32_73 = arith.constant 0 : i32
    %106 = tpu.memref_slice %arg3[%c14_i32_72, %c0_i32_73] : memref<16x128xf32, #tpu.memory_space<vmem>> -> memref<1x128xf32, #tpu.memory_space<vmem>>
    tpu.enqueue_dma source(%105 : memref<1x128xf32, #tpu.memory_space<vmem>>) target(%106 : memref<1x128xf32, #tpu.memory_space<vmem>>) target_semaphore(%arg4 : memref<!tpu.dma_semaphore, #tpu.memory_space<semaphore_mem>>)
    %c15_i32 = arith.constant 15 : i32
    %107 = arith.addi %1, %c15_i32 : i32
    %108 = arith.index_cast %107 : i32 to index
    %109 = memref.load %arg1[%108] : memref<16xi32, #tpu.memory_space<smem>>
    %c0_i32_74 = arith.constant 0 : i32
    %110 = arith.maxsi %109, %c0_i32_74 : i32
    %c49_i32_75 = arith.constant 49 : i32
    %111 = arith.minsi %110, %c49_i32_75 : i32
    %c0_i32_76 = arith.constant 0 : i32
    %112 = tpu.memref_slice %arg2[%111, %c0_i32_76] : memref<50x128xf32, #tpu.memory_space<vmem>> -> memref<1x128xf32, #tpu.memory_space<vmem>>
    %c15_i32_77 = arith.constant 15 : i32
    %c0_i32_78 = arith.constant 0 : i32
    %113 = tpu.memref_slice %arg3[%c15_i32_77, %c0_i32_78] : memref<16x128xf32, #tpu.memory_space<vmem>> -> memref<1x128xf32, #tpu.memory_space<vmem>>
    tpu.enqueue_dma source(%112 : memref<1x128xf32, #tpu.memory_space<vmem>>) target(%113 : memref<1x128xf32, #tpu.memory_space<vmem>>) target_semaphore(%arg4 : memref<!tpu.dma_semaphore, #tpu.memory_space<semaphore_mem>>)
    tpu.wait_dma2 semaphore(%arg4 : memref<!tpu.dma_semaphore, #tpu.memory_space<semaphore_mem>>) src(%arg3 : memref<16x128xf32, #tpu.memory_space<vmem>>) dst(%arg3 : memref<16x128xf32, #tpu.memory_space<vmem>>)
    return
  }
  func.func @transform_0(%arg0: i32, %arg1: memref<16xi32, #tpu.memory_space<smem>>) -> (i32, i32) {
    %c0_i32 = arith.constant 0 : i32
    %c0_i32_0 = arith.constant 0 : i32
    %c0_i32_1 = arith.constant 0 : i32
    return %c0_i32, %c0_i32_0 : i32, i32
  }
  func.func @transform_1(%arg0: i32, %arg1: memref<16xi32, #tpu.memory_space<smem>>) -> (i32, i32) {
    %c0_i32 = arith.constant 0 : i32
    %c0_i32_0 = arith.constant 0 : i32
    return %arg0, %c0_i32 : i32, i32
  }
}

</mosaic_0001>

<llo_original>
// kernel: tpu_custom_call.1
$region0: #{tpu_custom_call.1}
  #allocation0 [shape = 'u32[]', space=smem, size = 0x4, offset = 0x4, fixed_abs, tag = 'smem constant byte address 0x4 - core index']
  #allocation1 [shape = 'u32[72,128]{1,0:T(1,128)}', space=vmem, size = 0x9000, scoped, tag = 'internal scratch']
  #allocation2 [shape = 's32[1]{0}', space=sflag, size = 0x4, scoped, tag = 'scratch operand']
  #allocation3 [shape = 's32[1]{0}', space=sflag, size = 0x4, scoped, tag = 'scoped memory for tpu_custom_call.1']
  #allocation4 [shape = 'u8[512]{0}', space=smem, size = 0x200, scoped, tag = 'prefetched SMEM operand 0']
  #allocation9 [shape = 's32[]', space=sflag, size = 0x4, offset = 0, fixed_abs, tag = 'sflag constant byte address 0x0 - dummy sync flag']
  #allocation10 [shape = 's32[]', space=sflag, size = 0x4, offset = 0, fixed_abs, tag = 'sflag constant byte address 0x0 - dummy sync flag']
  #allocation11 [shape = 's32[]', space=sflag, size = 0x4, offset = 0, fixed_abs, tag = 'sflag constant byte address 0x0 - dummy sync flag']
  #allocation12 [shape = 's32[]', space=sflag, size = 0x4, offset = 0, fixed_abs, tag = 'sflag constant byte address 0x0 - dummy sync flag']
  #allocation13 [shape = 's32[]', space=sflag, size = 0x4, offset = 0, fixed_abs, tag = 'sflag constant byte address 0x0 - dummy sync flag']
  #allocation14 [shape = 's32[]', space=sflag, size = 0x4, offset = 0, fixed_abs, tag = 'sflag constant byte address 0x0 - dummy sync flag']
  #allocation15 [shape = 's32[]', space=sflag, size = 0x4, offset = 0, fixed_abs, tag = 'sflag constant byte address 0x0 - dummy sync flag']
  #allocation16 [shape = 's32[]', space=sflag, size = 0x4, offset = 0, fixed_abs, tag = 'sflag constant byte address 0x0 - dummy sync flag']
  #allocation17 [shape = 's32[]', space=sflag, size = 0x4, offset = 0, fixed_abs, tag = 'sflag constant byte address 0x0 - dummy sync flag']
  #allocation18 [shape = 's32[]', space=sflag, size = 0x4, offset = 0, fixed_abs, tag = 'sflag constant byte address 0x0 - dummy sync flag']
  #allocation19 [shape = 's32[]', space=sflag, size = 0x4, offset = 0, fixed_abs, tag = 'sflag constant byte address 0x0 - dummy sync flag']
  #allocation20 [shape = 's32[]', space=sflag, size = 0x4, offset = 0, fixed_abs, tag = 'sflag constant byte address 0x0 - dummy sync flag']
  #allocation21 [shape = 's32[]', space=sflag, size = 0x4, offset = 0, fixed_abs, tag = 'sflag constant byte address 0x0 - dummy sync flag']
  #allocation22 [shape = 's32[]', space=sflag, size = 0x4, offset = 0, fixed_abs, tag = 'sflag constant byte address 0x0 - dummy sync flag']
  #allocation23 [shape = 's32[]', space=sflag, size = 0x4, offset = 0, fixed_abs, tag = 'sflag constant byte address 0x0 - dummy sync flag']
  #allocation24 [shape = 's32[]', space=sflag, size = 0x4, offset = 0, fixed_abs, tag = 'sflag constant byte address 0x0 - dummy sync flag']
  %s0 = inlined_call_operand.hbm [shape: s32[16], index: 0, kind: input, shape index: {}]
  %s1 = inlined_call_operand.hbm [shape: f32[50,128], index: 1, kind: input, shape index: {}]
  %s2 = inlined_call_operand.hbm [shape: f32[16,128], index: 2, kind: output, shape index: {}]
  %s3 = sld [smem:[#allocation0]]
  $region498: #{tpu_custom_call.1} parent=0
    _
  %s5 = ssub.s32 1, %s3
  %s6 = scalar_select 0, %s5, %s3
  %s8 = sshll.u32 %s0, 4
  %s9 = int_to_ptr.hbm [resolvable:$true] %s8
  %11 = dma.hbm_to_smem %s9, 16, [#allocation4], [#allocation3]
  %13 = dma.done [#allocation3], 16
  %14 = sfence
  $region1: #{tpu_custom_call.1} parent=0
    #allocation5 [shape = 'u8[28672]{0}', space=vmem, size = 0x7000, scoped, tag = 'input window, operand 1, single buffered']
    #allocation6 [shape = 's32[1]{0}', space=sflag, size = 0x4, scoped, tag = 'scoped memory for tpu_custom_call.1']
    #allocation7 [shape = 's32[1]{0}', space=sflag, size = 0x4, scoped, tag = 'scoped memory for tpu_custom_call.1']
    #allocation8 [shape = 'u8[8192]{0}', space=vmem, size = 0x2000, scoped, tag = 'output window, operand 0, single buffered']
    %15 = vsyncpa [#allocation6], 0
    %16 = vsyncpa [#allocation7], 0
    // Predicated region
    $region2: #{tpu_custom_call.1} parent=1 // pred_check
      _
    $region3: #{tpu_custom_call.1} parent=1 // pred_check_branch
      %18 = sbr.rel (0) target = $region5
    $region4: #{tpu_custom_call.1} parent=1 // pred_region
      %20 = vsyncadd [#allocation6], 0
      %s21 = sshll.u32 %s1, 4
      %s22 = int_to_ptr.hbm [resolvable:$true] %s21
      %s23 = sshll.u32 [#allocation5], 4
      %s24 = int_to_ptr.vmem [resolvable:$true] %s23
      %29 = dma.hbm_to_vmem [thread:$0]  %s22, 896, %s24, [#allocation6], 128, 128, 8
    $region5: #{tpu_custom_call.1} parent=1 // pred_fallthru
      _
    // Predicated region
    $region6: #{tpu_custom_call.1} parent=1 // pred_check
      _
    $region7: #{tpu_custom_call.1} parent=1 // pred_check_branch
      %31 = sbr.rel (0) target = $region9
    $region8: #{tpu_custom_call.1} parent=1 // pred_region
      %33 = dma.done [#allocation6], 896
    $region9: #{tpu_custom_call.1} parent=1 // pred_fallthru
      _
    %s34 = smul.u32 0, 16
    %s35 = sld [smem:[#allocation4 + %s34]]
    %p36 = scmp.gt.s32.totalorder %s35, 0
    %s37 = scalar_select %p36, %s35, 0
    %p38 = scmp.lt.s32.totalorder %s37, 49
    %s39 = scalar_select %p38, %s37, 49
    %s40 = scalar_lea.vmem [#allocation5], %s39
    // Predicated region
    $region10: #{tpu_custom_call.1} parent=1 // pred_check
      _
    $region11: #{tpu_custom_call.1} parent=1 // pred_check_branch
      %42 = sbr.rel target = $region13
    $region12: #{tpu_custom_call.1} parent=1 // pred_region
      // Predicated region
      $region25: #{tpu_custom_call.1} parent=12 // pred_check
        _
      $region26: #{tpu_custom_call.1} parent=12 // pred_check_branch
        %58 = sbr.rel (0) target = $region28
      $region27: #{tpu_custom_call.1} parent=12 // pred_region
        %s60 = ssub.s32 2, 1
        loop: start=0, step=1, limit=1
        $region29: #{tpu_custom_call.1} parent=27 // loop_pre_header
          _
        $region30: #{tpu_custom_call.1} parent=27 // loop_header
          %s62 = sphi 0, %s66
          %p63 = scmp.ge.s32.totalorder %s62, 1
          %s67 = sphi %s40, %s40
          %s68 = sphi [#allocation8], [#allocation8]
        $region31: #{tpu_custom_call.1} parent=27 // loop_header_branch
          %65 = sbr.rel (%p63) target = $region35
        $region32: #{tpu_custom_call.1} parent=27 // loop_body
          %v69 = vld [vmem:[%s67] sm:%s60]
          %70 = vst [vmem:[%s68] sm:%s60] %v69
        $region33: #{tpu_custom_call.1} parent=27 // loop_footer
          %s66 = sadd.s32 1, %s62
        $region34: #{tpu_custom_call.1} parent=27 // loop_footer_branch
          %61 = sbr.rel target = $region30
        $region35: #{tpu_custom_call.1} parent=27 // loop_exit
          _
      $region28: #{tpu_custom_call.1} parent=12 // pred_fallthru
        _
    $region13: #{tpu_custom_call.1} parent=1 // pred_fallthru
      _
    // Predicated region
    $region14: #{tpu_custom_call.1} parent=1 // pred_check
      _
    $region15: #{tpu_custom_call.1} parent=1 // pred_check_branch
      %44 = sbr.rel (0) target = $region17
    $region16: #{tpu_custom_call.1} parent=1 // pred_region
      %s46 = ssub.s32 2, 1
      loop: start=0, step=1, limit=1
      $region18: #{tpu_custom_call.1} parent=16 // loop_pre_header
        _
      $region19: #{tpu_custom_call.1} parent=16 // loop_header
        %s48 = sphi 0, %s52
        %p49 = scmp.ge.s32.totalorder %s48, 1
        %s53 = sphi %s40, %s40
        %s54 = sphi [#allocation8], [#allocation8]
      $region20: #{tpu_custom_call.1} parent=16 // loop_header_branch
        %51 = sbr.rel (%p49) target = $region24
      $region21: #{tpu_custom_call.1} parent=16 // loop_body
        %v55 = vld [vmem:[%s53] sm:%s46]
        %56 = vst [vmem:[%s54] sm:%s46] %v55
      $region22: #{tpu_custom_call.1} parent=16 // loop_footer
        %s52 = sadd.s32 1, %s48
      $region23: #{tpu_custom_call.1} parent=16 // loop_footer_branch
        %47 = sbr.rel target = $region19
      $region24: #{tpu_custom_call.1} parent=16 // loop_exit
        _
    $region17: #{tpu_custom_call.1} parent=1 // pred_fallthru
      _
    // Predicated region
    $region36: #{tpu_custom_call.1} parent=1 // pred_check
      _
    $region37: #{tpu_custom_call.1} parent=1 // pred_check_branch
      %73 = sbr.rel (0) target = $region39
    $region38: #{tpu_custom_call.1} parent=1 // pred_region
      %74 = vsyncadd [#allocation2], 16
    $region39: #{tpu_custom_call.1} parent=1 // pred_fallthru
      _
    %s75 = sadd.s32 %s34, 1
    %s76 = sld [smem:[#allocation4 + %s75]]
    %p77 = scmp.gt.s32.totalorder %s76, 0
    %s78 = scalar_select %p77, %s76, 0
    %p79 = scmp.lt.s32.totalorder %s78, 49
    %s80 = scalar_select %p79, %s78, 49
    %s81 = scalar_lea.vmem [#allocation5], %s80
    %s82 = scalar_lea.vmem [#allocation8], 1
    // Predicated region
    $region40: #{tpu_custom_call.1} parent=1 // pred_check
      _
    $region41: #{tpu_custom_call.1} parent=1 // pred_check_branch
      %84 = sbr.rel target = $region43
    $region42: #{tpu_custom_call.1} parent=1 // pred_region
      // Predicated region
      $region55: #{tpu_custom_call.1} parent=42 // pred_check
        _
      $region56: #{tpu_custom_call.1} parent=42 // pred_check_branch
        %100 = sbr.rel (0) target = $region58
      $region57: #{tpu_custom_call.1} parent=42 // pred_region
        %s102 = ssub.s32 2, 1
        loop: start=0, step=1, limit=1
        $region59: #{tpu_custom_call.1} parent=57 // loop_pre_header
          _
        $region60: #{tpu_custom_call.1} parent=57 // loop_header
          %s104 = sphi 0, %s108
          %p105 = scmp.ge.s32.totalorder %s104, 1
          %s109 = sphi %s81, %s81
          %s110 = sphi %s82, %s82
        $region61: #{tpu_custom_call.1} parent=57 // loop_header_branch
          %107 = sbr.rel (%p105) target = $region65
        $region62: #{tpu_custom_call.1} parent=57 // loop_body
          %v111 = vld [vmem:[%s109] sm:%s102]
          %112 = vst [vmem:[%s110] sm:%s102] %v111
        $region63: #{tpu_custom_call.1} parent=57 // loop_footer
          %s108 = sadd.s32 1, %s104
        $region64: #{tpu_custom_call.1} parent=57 // loop_footer_branch
          %103 = sbr.rel target = $region60
        $region65: #{tpu_custom_call.1} parent=57 // loop_exit
          _
      $region58: #{tpu_custom_call.1} parent=42 // pred_fallthru
        _
    $region43: #{tpu_custom_call.1} parent=1 // pred_fallthru
      _
    // Predicated region
    $region44: #{tpu_custom_call.1} parent=1 // pred_check
      _
    $region45: #{tpu_custom_call.1} parent=1 // pred_check_branch
      %86 = sbr.rel (0) target = $region47
    $region46: #{tpu_custom_call.1} parent=1 // pred_region
      %s88 = ssub.s32 2, 1
      loop: start=0, step=1, limit=1
      $region48: #{tpu_custom_call.1} parent=46 // loop_pre_header
        _
      $region49: #{tpu_custom_call.1} parent=46 // loop_header
        %s90 = sphi 0, %s94
        %p91 = scmp.ge.s32.totalorder %s90, 1
        %s95 = sphi %s81, %s81
        %s96 = sphi %s82, %s82
      $region50: #{tpu_custom_call.1} parent=46 // loop_header_branch
        %93 = sbr.rel (%p91) target = $region54
      $region51: #{tpu_custom_call.1} parent=46 // loop_body
        %v97 = vld [vmem:[%s95] sm:%s88]
        %98 = vst [vmem:[%s96] sm:%s88] %v97
      $region52: #{tpu_custom_call.1} parent=46 // loop_footer
        %s94 = sadd.s32 1, %s90
      $region53: #{tpu_custom_call.1} parent=46 // loop_footer_branch
        %89 = sbr.rel target = $region49
      $region54: #{tpu_custom_call.1} parent=46 // loop_exit
        _
    $region47: #{tpu_custom_call.1} parent=1 // pred_fallthru
      _
    // Predicated region
    $region66: #{tpu_custom_call.1} parent=1 // pred_check
      _
    $region67: #{tpu_custom_call.1} parent=1 // pred_check_branch
      %115 = sbr.rel (0) target = $region69
    $region68: #{tpu_custom_call.1} parent=1 // pred_region
      %116 = vsyncadd [#allocation2], 16
    $region69: #{tpu_custom_call.1} parent=1 // pred_fallthru
      _
    %s117 = sadd.s32 %s34, 2
    %s118 = sld [smem:[#allocation4 + %s117]]
    %p119 = scmp.gt.s32.totalorder %s118, 0
    %s120 = scalar_select %p119, %s118, 0
    %p121 = scmp.lt.s32.totalorder %s120, 49
    %s122 = scalar_select %p121, %s120, 49
    %s123 = scalar_lea.vmem [#allocation5], %s122
    %s124 = scalar_lea.vmem [#allocation8], 2
    // Predicated region
    $region70: #{tpu_custom_call.1} parent=1 // pred_check
      _
    $region71: #{tpu_custom_call.1} parent=1 // pred_check_branch
      %126 = sbr.rel target = $region73
    $region72: #{tpu_custom_call.1} parent=1 // pred_region
      // Predicated region
      $region85: #{tpu_custom_call.1} parent=72 // pred_check
        _
      $region86: #{tpu_custom_call.1} parent=72 // pred_check_branch
        %142 = sbr.rel (0) target = $region88
      $region87: #{tpu_custom_call.1} parent=72 // pred_region
        %s144 = ssub.s32 2, 1
        loop: start=0, step=1, limit=1
        $region89: #{tpu_custom_call.1} parent=87 // loop_pre_header
          _
        $region90: #{tpu_custom_call.1} parent=87 // loop_header
          %s146 = sphi 0, %s150
          %p147 = scmp.ge.s32.totalorder %s146, 1
          %s151 = sphi %s123, %s123
          %s152 = sphi %s124, %s124
        $region91: #{tpu_custom_call.1} parent=87 // loop_header_branch
          %149 = sbr.rel (%p147) target = $region95
        $region92: #{tpu_custom_call.1} parent=87 // loop_body
          %v153 = vld [vmem:[%s151] sm:%s144]
          %154 = vst [vmem:[%s152] sm:%s144] %v153
        $region93: #{tpu_custom_call.1} parent=87 // loop_footer
          %s150 = sadd.s32 1, %s146
        $region94: #{tpu_custom_call.1} parent=87 // loop_footer_branch
          %145 = sbr.rel target = $region90
        $region95: #{tpu_custom_call.1} parent=87 // loop_exit
          _
      $region88: #{tpu_custom_call.1} parent=72 // pred_fallthru
        _
    $region73: #{tpu_custom_call.1} parent=1 // pred_fallthru
      _
    // Predicated region
    $region74: #{tpu_custom_call.1} parent=1 // pred_check
      _
    $region75: #{tpu_custom_call.1} parent=1 // pred_check_branch
      %128 = sbr.rel (0) target = $region77
    $region76: #{tpu_custom_call.1} parent=1 // pred_region
      %s130 = ssub.s32 2, 1
      loop: start=0, step=1, limit=1
      $region78: #{tpu_custom_call.1} parent=76 // loop_pre_header
        _
      $region79: #{tpu_custom_call.1} parent=76 // loop_header
        %s132 = sphi 0, %s136
        %p133 = scmp.ge.s32.totalorder %s132, 1
        %s137 = sphi %s123, %s123
        %s138 = sphi %s124, %s124
      $region80: #{tpu_custom_call.1} parent=76 // loop_header_branch
        %135 = sbr.rel (%p133) target = $region84
      $region81: #{tpu_custom_call.1} parent=76 // loop_body
        %v139 = vld [vmem:[%s137] sm:%s130]
        %140 = vst [vmem:[%s138] sm:%s130] %v139
      $region82: #{tpu_custom_call.1} parent=76 // loop_footer
        %s136 = sadd.s32 1, %s132
      $region83: #{tpu_custom_call.1} parent=76 // loop_footer_branch
        %131 = sbr.rel target = $region79
      $region84: #{tpu_custom_call.1} parent=76 // loop_exit
        _
    $region77: #{tpu_custom_call.1} parent=1 // pred_fallthru
      _
    // Predicated region
    $region96: #{tpu_custom_call.1} parent=1 // pred_check
      _
    $region97: #{tpu_custom_call.1} parent=1 // pred_check_branch
      %157 = sbr.rel (0) target = $region99
    $region98: #{tpu_custom_call.1} parent=1 // pred_region
      %158 = vsyncadd [#allocation2], 16
    $region99: #{tpu_custom_call.1} parent=1 // pred_fallthru
      _
    %s159 = sadd.s32 %s34, 3
    %s160 = sld [smem:[#allocation4 + %s159]]
    %p161 = scmp.gt.s32.totalorder %s160, 0
    %s162 = scalar_select %p161, %s160, 0
    %p163 = scmp.lt.s32.totalorder %s162, 49
    %s164 = scalar_select %p163, %s162, 49
    %s165 = scalar_lea.vmem [#allocation5], %s164
    %s166 = scalar_lea.vmem [#allocation8], 3
    // Predicated region
    $region100: #{tpu_custom_call.1} parent=1 // pred_check
      _
    $region101: #{tpu_custom_call.1} parent=1 // pred_check_branch
      %168 = sbr.rel target = $region103
    $region102: #{tpu_custom_call.1} parent=1 // pred_region
      // Predicated region
      $region115: #{tpu_custom_call.1} parent=102 // pred_check
        _
      $region116: #{tpu_custom_call.1} parent=102 // pred_check_branch
        %184 = sbr.rel (0) target = $region118
      $region117: #{tpu_custom_call.1} parent=102 // pred_region
        %s186 = ssub.s32 2, 1
        loop: start=0, step=1, limit=1
        $region119: #{tpu_custom_call.1} parent=117 // loop_pre_header
          _
        $region120: #{tpu_custom_call.1} parent=117 // loop_header
          %s188 = sphi 0, %s192
          %p189 = scmp.ge.s32.totalorder %s188, 1
          %s193 = sphi %s165, %s165
          %s194 = sphi %s166, %s166
        $region121: #{tpu_custom_call.1} parent=117 // loop_header_branch
          %191 = sbr.rel (%p189) target = $region125
        $region122: #{tpu_custom_call.1} parent=117 // loop_body
          %v195 = vld [vmem:[%s193] sm:%s186]
          %196 = vst [vmem:[%s194] sm:%s186] %v195
        $region123: #{tpu_custom_call.1} parent=117 // loop_footer
          %s192 = sadd.s32 1, %s188
        $region124: #{tpu_custom_call.1} parent=117 // loop_footer_branch
          %187 = sbr.rel target = $region120
        $region125: #{tpu_custom_call.1} parent=117 // loop_exit
          _
      $region118: #{tpu_custom_call.1} parent=102 // pred_fallthru
        _
    $region103: #{tpu_custom_call.1} parent=1 // pred_fallthru
      _
    // Predicated region
    $region104: #{tpu_custom_call.1} parent=1 // pred_check
      _
    $region105: #{tpu_custom_call.1} parent=1 // pred_check_branch
      %170 = sbr.rel (0) target = $region107
    $region106: #{tpu_custom_call.1} parent=1 // pred_region
      %s172 = ssub.s32 2, 1
      loop: start=0, step=1, limit=1
      $region108: #{tpu_custom_call.1} parent=106 // loop_pre_header
        _
      $region109: #{tpu_custom_call.1} parent=106 // loop_header
        %s174 = sphi 0, %s178
        %p175 = scmp.ge.s32.totalorder %s174, 1
        %s179 = sphi %s165, %s165
        %s180 = sphi %s166, %s166
      $region110: #{tpu_custom_call.1} parent=106 // loop_header_branch
        %177 = sbr.rel (%p175) target = $region114
      $region111: #{tpu_custom_call.1} parent=106 // loop_body
        %v181 = vld [vmem:[%s179] sm:%s172]
        %182 = vst [vmem:[%s180] sm:%s172] %v181
      $region112: #{tpu_custom_call.1} parent=106 // loop_footer
        %s178 = sadd.s32 1, %s174
      $region113: #{tpu_custom_call.1} parent=106 // loop_footer_branch
        %173 = sbr.rel target = $region109
      $region114: #{tpu_custom_call.1} parent=106 // loop_exit
        _
    $region107: #{tpu_custom_call.1} parent=1 // pred_fallthru
      _
    // Predicated region
    $region126: #{tpu_custom_call.1} parent=1 // pred_check
      _
    $region127: #{tpu_custom_call.1} parent=1 // pred_check_branch
      %199 = sbr.rel (0) target = $region129
    $region128: #{tpu_custom_call.1} parent=1 // pred_region
      %200 = vsyncadd [#allocation2], 16
    $region129: #{tpu_custom_call.1} parent=1 // pred_fallthru
      _
    %s201 = sadd.s32 %s34, 4
    %s202 = sld [smem:[#allocation4 + %s201]]
    %p203 = scmp.gt.s32.totalorder %s202, 0
    %s204 = scalar_select %p203, %s202, 0
    %p205 = scmp.lt.s32.totalorder %s204, 49
    %s206 = scalar_select %p205, %s204, 49
    %s207 = scalar_lea.vmem [#allocation5], %s206
    %s208 = scalar_lea.vmem [#allocation8], 4
    // Predicated region
    $region130: #{tpu_custom_call.1} parent=1 // pred_check
      _
    $region131: #{tpu_custom_call.1} parent=1 // pred_check_branch
      %210 = sbr.rel target = $region133
    $region132: #{tpu_custom_call.1} parent=1 // pred_region
      // Predicated region
      $region145: #{tpu_custom_call.1} parent=132 // pred_check
        _
      $region146: #{tpu_custom_call.1} parent=132 // pred_check_branch
        %226 = sbr.rel (0) target = $region148
      $region147: #{tpu_custom_call.1} parent=132 // pred_region
        %s228 = ssub.s32 2, 1
        loop: start=0, step=1, limit=1
        $region149: #{tpu_custom_call.1} parent=147 // loop_pre_header
          _
        $region150: #{tpu_custom_call.1} parent=147 // loop_header
          %s230 = sphi 0, %s234
          %p231 = scmp.ge.s32.totalorder %s230, 1
          %s235 = sphi %s207, %s207
          %s236 = sphi %s208, %s208
        $region151: #{tpu_custom_call.1} parent=147 // loop_header_branch
          %233 = sbr.rel (%p231) target = $region155
        $region152: #{tpu_custom_call.1} parent=147 // loop_body
          %v237 = vld [vmem:[%s235] sm:%s228]
          %238 = vst [vmem:[%s236] sm:%s228] %v237
        $region153: #{tpu_custom_call.1} parent=147 // loop_footer
          %s234 = sadd.s32 1, %s230
        $region154: #{tpu_custom_call.1} parent=147 // loop_footer_branch
          %229 = sbr.rel target = $region150
        $region155: #{tpu_custom_call.1} parent=147 // loop_exit
          _
      $region148: #{tpu_custom_call.1} parent=132 // pred_fallthru
        _
    $region133: #{tpu_custom_call.1} parent=1 // pred_fallthru
      _
    // Predicated region
    $region134: #{tpu_custom_call.1} parent=1 // pred_check
      _
    $region135: #{tpu_custom_call.1} parent=1 // pred_check_branch
      %212 = sbr.rel (0) target = $region137
    $region136: #{tpu_custom_call.1} parent=1 // pred_region
      %s214 = ssub.s32 2, 1
      loop: start=0, step=1, limit=1
      $region138: #{tpu_custom_call.1} parent=136 // loop_pre_header
        _
      $region139: #{tpu_custom_call.1} parent=136 // loop_header
        %s216 = sphi 0, %s220
        %p217 = scmp.ge.s32.totalorder %s216, 1
        %s221 = sphi %s207, %s207
        %s222 = sphi %s208, %s208
      $region140: #{tpu_custom_call.1} parent=136 // loop_header_branch
        %219 = sbr.rel (%p217) target = $region144
      $region141: #{tpu_custom_call.1} parent=136 // loop_body
        %v223 = vld [vmem:[%s221] sm:%s214]
        %224 = vst [vmem:[%s222] sm:%s214] %v223
      $region142: #{tpu_custom_call.1} parent=136 // loop_footer
        %s220 = sadd.s32 1, %s216
      $region143: #{tpu_custom_call.1} parent=136 // loop_footer_branch
        %215 = sbr.rel target = $region139
      $region144: #{tpu_custom_call.1} parent=136 // loop_exit
        _
    $region137: #{tpu_custom_call.1} parent=1 // pred_fallthru
      _
    // Predicated region
    $region156: #{tpu_custom_call.1} parent=1 // pred_check
      _
    $region157: #{tpu_custom_call.1} parent=1 // pred_check_branch
      %241 = sbr.rel (0) target = $region159
    $region158: #{tpu_custom_call.1} parent=1 // pred_region
      %242 = vsyncadd [#allocation2], 16
    $region159: #{tpu_custom_call.1} parent=1 // pred_fallthru
      _
    %s243 = sadd.s32 %s34, 5
    %s244 = sld [smem:[#allocation4 + %s243]]
    %p245 = scmp.gt.s32.totalorder %s244, 0
    %s246 = scalar_select %p245, %s244, 0
    %p247 = scmp.lt.s32.totalorder %s246, 49
    %s248 = scalar_select %p247, %s246, 49
    %s249 = scalar_lea.vmem [#allocation5], %s248
    %s250 = scalar_lea.vmem [#allocation8], 5
    // Predicated region
    $region160: #{tpu_custom_call.1} parent=1 // pred_check
      _
    $region161: #{tpu_custom_call.1} parent=1 // pred_check_branch
      %252 = sbr.rel target = $region163
    $region162: #{tpu_custom_call.1} parent=1 // pred_region
      // Predicated region
      $region175: #{tpu_custom_call.1} parent=162 // pred_check
        _
      $region176: #{tpu_custom_call.1} parent=162 // pred_check_branch
        %268 = sbr.rel (0) target = $region178
      $region177: #{tpu_custom_call.1} parent=162 // pred_region
        %s270 = ssub.s32 2, 1
        loop: start=0, step=1, limit=1
        $region179: #{tpu_custom_call.1} parent=177 // loop_pre_header
          _
        $region180: #{tpu_custom_call.1} parent=177 // loop_header
          %s272 = sphi 0, %s276
          %p273 = scmp.ge.s32.totalorder %s272, 1
          %s277 = sphi %s249, %s249
          %s278 = sphi %s250, %s250
        $region181: #{tpu_custom_call.1} parent=177 // loop_header_branch
          %275 = sbr.rel (%p273) target = $region185
        $region182: #{tpu_custom_call.1} parent=177 // loop_body
          %v279 = vld [vmem:[%s277] sm:%s270]
          %280 = vst [vmem:[%s278] sm:%s270] %v279
        $region183: #{tpu_custom_call.1} parent=177 // loop_footer
          %s276 = sadd.s32 1, %s272
        $region184: #{tpu_custom_call.1} parent=177 // loop_footer_branch
          %271 = sbr.rel target = $region180
        $region185: #{tpu_custom_call.1} parent=177 // loop_exit
          _
      $region178: #{tpu_custom_call.1} parent=162 // pred_fallthru
        _
    $region163: #{tpu_custom_call.1} parent=1 // pred_fallthru
      _
    // Predicated region
    $region164: #{tpu_custom_call.1} parent=1 // pred_check
      _
    $region165: #{tpu_custom_call.1} parent=1 // pred_check_branch
      %254 = sbr.rel (0) target = $region167
    $region166: #{tpu_custom_call.1} parent=1 // pred_region
      %s256 = ssub.s32 2, 1
      loop: start=0, step=1, limit=1
      $region168: #{tpu_custom_call.1} parent=166 // loop_pre_header
        _
      $region169: #{tpu_custom_call.1} parent=166 // loop_header
        %s258 = sphi 0, %s262
        %p259 = scmp.ge.s32.totalorder %s258, 1
        %s263 = sphi %s249, %s249
        %s264 = sphi %s250, %s250
      $region170: #{tpu_custom_call.1} parent=166 // loop_header_branch
        %261 = sbr.rel (%p259) target = $region174
      $region171: #{tpu_custom_call.1} parent=166 // loop_body
        %v265 = vld [vmem:[%s263] sm:%s256]
        %266 = vst [vmem:[%s264] sm:%s256] %v265
      $region172: #{tpu_custom_call.1} parent=166 // loop_footer
        %s262 = sadd.s32 1, %s258
      $region173: #{tpu_custom_call.1} parent=166 // loop_footer_branch
        %257 = sbr.rel target = $region169
      $region174: #{tpu_custom_call.1} parent=166 // loop_exit
        _
    $region167: #{tpu_custom_call.1} parent=1 // pred_fallthru
      _
    // Predicated region
    $region186: #{tpu_custom_call.1} parent=1 // pred_check
      _
    $region187: #{tpu_custom_call.1} parent=1 // pred_check_branch
      %283 = sbr.rel (0) target = $region189
    $region188: #{tpu_custom_call.1} parent=1 // pred_region
      %284 = vsyncadd [#allocation2], 16
    $region189: #{tpu_custom_call.1} parent=1 // pred_fallthru
      _
    %s285 = sadd.s32 %s34, 6
    %s286 = sld [smem:[#allocation4 + %s285]]
    %p287 = scmp.gt.s32.totalorder %s286, 0
    %s288 = scalar_select %p287, %s286, 0
    %p289 = scmp.lt.s32.totalorder %s288, 49
    %s290 = scalar_select %p289, %s288, 49
    %s291 = scalar_lea.vmem [#allocation5], %s290
    %s292 = scalar_lea.vmem [#allocation8], 6
    // Predicated region
    $region190: #{tpu_custom_call.1} parent=1 // pred_check
      _
    $region191: #{tpu_custom_call.1} parent=1 // pred_check_branch
      %294 = sbr.rel target = $region193
    $region192: #{tpu_custom_call.1} parent=1 // pred_region
      // Predicated region
      $region205: #{tpu_custom_call.1} parent=192 // pred_check
        _
      $region206: #{tpu_custom_call.1} parent=192 // pred_check_branch
        %310 = sbr.rel (0) target = $region208
      $region207: #{tpu_custom_call.1} parent=192 // pred_region
        %s312 = ssub.s32 2, 1
        loop: start=0, step=1, limit=1
        $region209: #{tpu_custom_call.1} parent=207 // loop_pre_header
          _
        $region210: #{tpu_custom_call.1} parent=207 // loop_header
          %s314 = sphi 0, %s318
          %p315 = scmp.ge.s32.totalorder %s314, 1
          %s319 = sphi %s291, %s291
          %s320 = sphi %s292, %s292
        $region211: #{tpu_custom_call.1} parent=207 // loop_header_branch
          %317 = sbr.rel (%p315) target = $region215
        $region212: #{tpu_custom_call.1} parent=207 // loop_body
          %v321 = vld [vmem:[%s319] sm:%s312]
          %322 = vst [vmem:[%s320] sm:%s312] %v321
        $region213: #{tpu_custom_call.1} parent=207 // loop_footer
          %s318 = sadd.s32 1, %s314
        $region214: #{tpu_custom_call.1} parent=207 // loop_footer_branch
          %313 = sbr.rel target = $region210
        $region215: #{tpu_custom_call.1} parent=207 // loop_exit
          _
      $region208: #{tpu_custom_call.1} parent=192 // pred_fallthru
        _
    $region193: #{tpu_custom_call.1} parent=1 // pred_fallthru
      _
    // Predicated region
    $region194: #{tpu_custom_call.1} parent=1 // pred_check
      _
    $region195: #{tpu_custom_call.1} parent=1 // pred_check_branch
      %296 = sbr.rel (0) target = $region197
    $region196: #{tpu_custom_call.1} parent=1 // pred_region
      %s298 = ssub.s32 2, 1
      loop: start=0, step=1, limit=1
      $region198: #{tpu_custom_call.1} parent=196 // loop_pre_header
        _
      $region199: #{tpu_custom_call.1} parent=196 // loop_header
        %s300 = sphi 0, %s304
        %p301 = scmp.ge.s32.totalorder %s300, 1
        %s305 = sphi %s291, %s291
        %s306 = sphi %s292, %s292
      $region200: #{tpu_custom_call.1} parent=196 // loop_header_branch
        %303 = sbr.rel (%p301) target = $region204
      $region201: #{tpu_custom_call.1} parent=196 // loop_body
        %v307 = vld [vmem:[%s305] sm:%s298]
        %308 = vst [vmem:[%s306] sm:%s298] %v307
      $region202: #{tpu_custom_call.1} parent=196 // loop_footer
        %s304 = sadd.s32 1, %s300
      $region203: #{tpu_custom_call.1} parent=196 // loop_footer_branch
        %299 = sbr.rel target = $region199
      $region204: #{tpu_custom_call.1} parent=196 // loop_exit
        _
    $region197: #{tpu_custom_call.1} parent=1 // pred_fallthru
      _
    // Predicated region
    $region216: #{tpu_custom_call.1} parent=1 // pred_check
      _
    $region217: #{tpu_custom_call.1} parent=1 // pred_check_branch
      %325 = sbr.rel (0) target = $region219
    $region218: #{tpu_custom_call.1} parent=1 // pred_region
      %326 = vsyncadd [#allocation2], 16
    $region219: #{tpu_custom_call.1} parent=1 // pred_fallthru
      _
    %s327 = sadd.s32 %s34, 7
    %s328 = sld [smem:[#allocation4 + %s327]]
    %p329 = scmp.gt.s32.totalorder %s328, 0
    %s330 = scalar_select %p329, %s328, 0
    %p331 = scmp.lt.s32.totalorder %s330, 49
    %s332 = scalar_select %p331, %s330, 49
    %s333 = scalar_lea.vmem [#allocation5], %s332
    %s334 = scalar_lea.vmem [#allocation8], 7
    // Predicated region
    $region220: #{tpu_custom_call.1} parent=1 // pred_check
      _
    $region221: #{tpu_custom_call.1} parent=1 // pred_check_branch
      %336 = sbr.rel target = $region223
    $region222: #{tpu_custom_call.1} parent=1 // pred_region
      // Predicated region
      $region235: #{tpu_custom_call.1} parent=222 // pred_check
        _
      $region236: #{tpu_custom_call.1} parent=222 // pred_check_branch
        %352 = sbr.rel (0) target = $region238
      $region237: #{tpu_custom_call.1} parent=222 // pred_region
        %s354 = ssub.s32 2, 1
        loop: start=0, step=1, limit=1
        $region239: #{tpu_custom_call.1} parent=237 // loop_pre_header
          _
        $region240: #{tpu_custom_call.1} parent=237 // loop_header
          %s356 = sphi 0, %s360
          %p357 = scmp.ge.s32.totalorder %s356, 1
          %s361 = sphi %s333, %s333
          %s362 = sphi %s334, %s334
        $region241: #{tpu_custom_call.1} parent=237 // loop_header_branch
          %359 = sbr.rel (%p357) target = $region245
        $region242: #{tpu_custom_call.1} parent=237 // loop_body
          %v363 = vld [vmem:[%s361] sm:%s354]
          %364 = vst [vmem:[%s362] sm:%s354] %v363
        $region243: #{tpu_custom_call.1} parent=237 // loop_footer
          %s360 = sadd.s32 1, %s356
        $region244: #{tpu_custom_call.1} parent=237 // loop_footer_branch
          %355 = sbr.rel target = $region240
        $region245: #{tpu_custom_call.1} parent=237 // loop_exit
          _
      $region238: #{tpu_custom_call.1} parent=222 // pred_fallthru
        _
    $region223: #{tpu_custom_call.1} parent=1 // pred_fallthru
      _
    // Predicated region
    $region224: #{tpu_custom_call.1} parent=1 // pred_check
      _
    $region225: #{tpu_custom_call.1} parent=1 // pred_check_branch
      %338 = sbr.rel (0) target = $region227
    $region226: #{tpu_custom_call.1} parent=1 // pred_region
      %s340 = ssub.s32 2, 1
      loop: start=0, step=1, limit=1
      $region228: #{tpu_custom_call.1} parent=226 // loop_pre_header
        _
      $region229: #{tpu_custom_call.1} parent=226 // loop_header
        %s342 = sphi 0, %s346
        %p343 = scmp.ge.s32.totalorder %s342, 1
        %s347 = sphi %s333, %s333
        %s348 = sphi %s334, %s334
      $region230: #{tpu_custom_call.1} parent=226 // loop_header_branch
        %345 = sbr.rel (%p343) target = $region234
      $region231: #{tpu_custom_call.1} parent=226 // loop_body
        %v349 = vld [vmem:[%s347] sm:%s340]
        %350 = vst [vmem:[%s348] sm:%s340] %v349
      $region232: #{tpu_custom_call.1} parent=226 // loop_footer
        %s346 = sadd.s32 1, %s342
      $region233: #{tpu_custom_call.1} parent=226 // loop_footer_branch
        %341 = sbr.rel target = $region229
      $region234: #{tpu_custom_call.1} parent=226 // loop_exit
        _
    $region227: #{tpu_custom_call.1} parent=1 // pred_fallthru
      _
    // Predicated region
    $region246: #{tpu_custom_call.1} parent=1 // pred_check
      _
    $region247: #{tpu_custom_call.1} parent=1 // pred_check_branch
      %367 = sbr.rel (0) target = $region249
    $region248: #{tpu_custom_call.1} parent=1 // pred_region
      %368 = vsyncadd [#allocation2], 16
    $region249: #{tpu_custom_call.1} parent=1 // pred_fallthru
      _
    %s369 = sadd.s32 %s34, 8
    %s370 = sld [smem:[#allocation4 + %s369]]
    %p371 = scmp.gt.s32.totalorder %s370, 0
    %s372 = scalar_select %p371, %s370, 0
    %p373 = scmp.lt.s32.totalorder %s372, 49
    %s374 = scalar_select %p373, %s372, 49
    %s375 = scalar_lea.vmem [#allocation5], %s374
    %s376 = scalar_lea.vmem [#allocation8], 8
    // Predicated region
    $region250: #{tpu_custom_call.1} parent=1 // pred_check
      _
    $region251: #{tpu_custom_call.1} parent=1 // pred_check_branch
      %378 = sbr.rel target = $region253
    $region252: #{tpu_custom_call.1} parent=1 // pred_region
      // Predicated region
      $region265: #{tpu_custom_call.1} parent=252 // pred_check
        _
      $region266: #{tpu_custom_call.1} parent=252 // pred_check_branch
        %394 = sbr.rel (0) target = $region268
      $region267: #{tpu_custom_call.1} parent=252 // pred_region
        %s396 = ssub.s32 2, 1
        loop: start=0, step=1, limit=1
        $region269: #{tpu_custom_call.1} parent=267 // loop_pre_header
          _
        $region270: #{tpu_custom_call.1} parent=267 // loop_header
          %s398 = sphi 0, %s402
          %p399 = scmp.ge.s32.totalorder %s398, 1
          %s403 = sphi %s375, %s375
          %s404 = sphi %s376, %s376
        $region271: #{tpu_custom_call.1} parent=267 // loop_header_branch
          %401 = sbr.rel (%p399) target = $region275
        $region272: #{tpu_custom_call.1} parent=267 // loop_body
          %v405 = vld [vmem:[%s403] sm:%s396]
          %406 = vst [vmem:[%s404] sm:%s396] %v405
        $region273: #{tpu_custom_call.1} parent=267 // loop_footer
          %s402 = sadd.s32 1, %s398
        $region274: #{tpu_custom_call.1} parent=267 // loop_footer_branch
          %397 = sbr.rel target = $region270
        $region275: #{tpu_custom_call.1} parent=267 // loop_exit
          _
      $region268: #{tpu_custom_call.1} parent=252 // pred_fallthru
        _
    $region253: #{tpu_custom_call.1} parent=1 // pred_fallthru
      _
    // Predicated region
    $region254: #{tpu_custom_call.1} parent=1 // pred_check
      _
    $region255: #{tpu_custom_call.1} parent=1 // pred_check_branch
      %380 = sbr.rel (0) target = $region257
    $region256: #{tpu_custom_call.1} parent=1 // pred_region
      %s382 = ssub.s32 2, 1
      loop: start=0, step=1, limit=1
      $region258: #{tpu_custom_call.1} parent=256 // loop_pre_header
        _
      $region259: #{tpu_custom_call.1} parent=256 // loop_header
        %s384 = sphi 0, %s388
        %p385 = scmp.ge.s32.totalorder %s384, 1
        %s389 = sphi %s375, %s375
        %s390 = sphi %s376, %s376
      $region260: #{tpu_custom_call.1} parent=256 // loop_header_branch
        %387 = sbr.rel (%p385) target = $region264
      $region261: #{tpu_custom_call.1} parent=256 // loop_body
        %v391 = vld [vmem:[%s389] sm:%s382]
        %392 = vst [vmem:[%s390] sm:%s382] %v391
      $region262: #{tpu_custom_call.1} parent=256 // loop_footer
        %s388 = sadd.s32 1, %s384
      $region263: #{tpu_custom_call.1} parent=256 // loop_footer_branch
        %383 = sbr.rel target = $region259
      $region264: #{tpu_custom_call.1} parent=256 // loop_exit
        _
    $region257: #{tpu_custom_call.1} parent=1 // pred_fallthru
      _
    // Predicated region
    $region276: #{tpu_custom_call.1} parent=1 // pred_check
      _
    $region277: #{tpu_custom_call.1} parent=1 // pred_check_branch
      %409 = sbr.rel (0) target = $region279
    $region278: #{tpu_custom_call.1} parent=1 // pred_region
      %410 = vsyncadd [#allocation2], 16
    $region279: #{tpu_custom_call.1} parent=1 // pred_fallthru
      _
    %s411 = sadd.s32 %s34, 9
    %s412 = sld [smem:[#allocation4 + %s411]]
    %p413 = scmp.gt.s32.totalorder %s412, 0
    %s414 = scalar_select %p413, %s412, 0
    %p415 = scmp.lt.s32.totalorder %s414, 49
    %s416 = scalar_select %p415, %s414, 49
    %s417 = scalar_lea.vmem [#allocation5], %s416
    %s418 = scalar_lea.vmem [#allocation8], 9
    // Predicated region
    $region280: #{tpu_custom_call.1} parent=1 // pred_check
      _
    $region281: #{tpu_custom_call.1} parent=1 // pred_check_branch
      %420 = sbr.rel target = $region283
    $region282: #{tpu_custom_call.1} parent=1 // pred_region
      // Predicated region
      $region295: #{tpu_custom_call.1} parent=282 // pred_check
        _
      $region296: #{tpu_custom_call.1} parent=282 // pred_check_branch
        %436 = sbr.rel (0) target = $region298
      $region297: #{tpu_custom_call.1} parent=282 // pred_region
        %s438 = ssub.s32 2, 1
        loop: start=0, step=1, limit=1
        $region299: #{tpu_custom_call.1} parent=297 // loop_pre_header
          _
        $region300: #{tpu_custom_call.1} parent=297 // loop_header
          %s440 = sphi 0, %s444
          %p441 = scmp.ge.s32.totalorder %s440, 1
          %s445 = sphi %s417, %s417
          %s446 = sphi %s418, %s418
        $region301: #{tpu_custom_call.1} parent=297 // loop_header_branch
          %443 = sbr.rel (%p441) target = $region305
        $region302: #{tpu_custom_call.1} parent=297 // loop_body
          %v447 = vld [vmem:[%s445] sm:%s438]
          %448 = vst [vmem:[%s446] sm:%s438] %v447
        $region303: #{tpu_custom_call.1} parent=297 // loop_footer
          %s444 = sadd.s32 1, %s440
        $region304: #{tpu_custom_call.1} parent=297 // loop_footer_branch
          %439 = sbr.rel target = $region300
        $region305: #{tpu_custom_call.1} parent=297 // loop_exit
          _
      $region298: #{tpu_custom_call.1} parent=282 // pred_fallthru
        _
    $region283: #{tpu_custom_call.1} parent=1 // pred_fallthru
      _
    // Predicated region
    $region284: #{tpu_custom_call.1} parent=1 // pred_check
      _
    $region285: #{tpu_custom_call.1} parent=1 // pred_check_branch
      %422 = sbr.rel (0) target = $region287
    $region286: #{tpu_custom_call.1} parent=1 // pred_region
      %s424 = ssub.s32 2, 1
      loop: start=0, step=1, limit=1
      $region288: #{tpu_custom_call.1} parent=286 // loop_pre_header
        _
      $region289: #{tpu_custom_call.1} parent=286 // loop_header
        %s426 = sphi 0, %s430
        %p427 = scmp.ge.s32.totalorder %s426, 1
        %s431 = sphi %s417, %s417
        %s432 = sphi %s418, %s418
      $region290: #{tpu_custom_call.1} parent=286 // loop_header_branch
        %429 = sbr.rel (%p427) target = $region294
      $region291: #{tpu_custom_call.1} parent=286 // loop_body
        %v433 = vld [vmem:[%s431] sm:%s424]
        %434 = vst [vmem:[%s432] sm:%s424] %v433
      $region292: #{tpu_custom_call.1} parent=286 // loop_footer
        %s430 = sadd.s32 1, %s426
      $region293: #{tpu_custom_call.1} parent=286 // loop_footer_branch
        %425 = sbr.rel target = $region289
      $region294: #{tpu_custom_call.1} parent=286 // loop_exit
        _
    $region287: #{tpu_custom_call.1} parent=1 // pred_fallthru
      _
    // Predicated region
    $region306: #{tpu_custom_call.1} parent=1 // pred_check
      _
    $region307: #{tpu_custom_call.1} parent=1 // pred_check_branch
      %451 = sbr.rel (0) target = $region309
    $region308: #{tpu_custom_call.1} parent=1 // pred_region
      %452 = vsyncadd [#allocation2], 16
    $region309: #{tpu_custom_call.1} parent=1 // pred_fallthru
      _
    %s453 = sadd.s32 %s34, 10
    %s454 = sld [smem:[#allocation4 + %s453]]
    %p455 = scmp.gt.s32.totalorder %s454, 0
    %s456 = scalar_select %p455, %s454, 0
    %p457 = scmp.lt.s32.totalorder %s456, 49
    %s458 = scalar_select %p457, %s456, 49
    %s459 = scalar_lea.vmem [#allocation5], %s458
    %s460 = scalar_lea.vmem [#allocation8], 10
    // Predicated region
    $region310: #{tpu_custom_call.1} parent=1 // pred_check
      _
    $region311: #{tpu_custom_call.1} parent=1 // pred_check_branch
      %462 = sbr.rel target = $region313
    $region312: #{tpu_custom_call.1} parent=1 // pred_region
      // Predicated region
      $region325: #{tpu_custom_call.1} parent=312 // pred_check
        _
      $region326: #{tpu_custom_call.1} parent=312 // pred_check_branch
        %478 = sbr.rel (0) target = $region328
      $region327: #{tpu_custom_call.1} parent=312 // pred_region
        %s480 = ssub.s32 2, 1
        loop: start=0, step=1, limit=1
        $region329: #{tpu_custom_call.1} parent=327 // loop_pre_header
          _
        $region330: #{tpu_custom_call.1} parent=327 // loop_header
          %s482 = sphi 0, %s486
          %p483 = scmp.ge.s32.totalorder %s482, 1
          %s487 = sphi %s459, %s459
          %s488 = sphi %s460, %s460
        $region331: #{tpu_custom_call.1} parent=327 // loop_header_branch
          %485 = sbr.rel (%p483) target = $region335
        $region332: #{tpu_custom_call.1} parent=327 // loop_body
          %v489 = vld [vmem:[%s487] sm:%s480]
          %490 = vst [vmem:[%s488] sm:%s480] %v489
        $region333: #{tpu_custom_call.1} parent=327 // loop_footer
          %s486 = sadd.s32 1, %s482
        $region334: #{tpu_custom_call.1} parent=327 // loop_footer_branch
          %481 = sbr.rel target = $region330
        $region335: #{tpu_custom_call.1} parent=327 // loop_exit
          _
      $region328: #{tpu_custom_call.1} parent=312 // pred_fallthru
        _
    $region313: #{tpu_custom_call.1} parent=1 // pred_fallthru
      _
    // Predicated region
    $region314: #{tpu_custom_call.1} parent=1 // pred_check
      _
    $region315: #{tpu_custom_call.1} parent=1 // pred_check_branch
      %464 = sbr.rel (0) target = $region317
    $region316: #{tpu_custom_call.1} parent=1 // pred_region
      %s466 = ssub.s32 2, 1
      loop: start=0, step=1, limit=1
      $region318: #{tpu_custom_call.1} parent=316 // loop_pre_header
        _
      $region319: #{tpu_custom_call.1} parent=316 // loop_header
        %s468 = sphi 0, %s472
        %p469 = scmp.ge.s32.totalorder %s468, 1
        %s473 = sphi %s459, %s459
        %s474 = sphi %s460, %s460
      $region320: #{tpu_custom_call.1} parent=316 // loop_header_branch
        %471 = sbr.rel (%p469) target = $region324
      $region321: #{tpu_custom_call.1} parent=316 // loop_body
        %v475 = vld [vmem:[%s473] sm:%s466]
        %476 = vst [vmem:[%s474] sm:%s466] %v475
      $region322: #{tpu_custom_call.1} parent=316 // loop_footer
        %s472 = sadd.s32 1, %s468
      $region323: #{tpu_custom_call.1} parent=316 // loop_footer_branch
        %467 = sbr.rel target = $region319
      $region324: #{tpu_custom_call.1} parent=316 // loop_exit
        _
    $region317: #{tpu_custom_call.1} parent=1 // pred_fallthru
      _
    // Predicated region
    $region336: #{tpu_custom_call.1} parent=1 // pred_check
      _
    $region337: #{tpu_custom_call.1} parent=1 // pred_check_branch
      %493 = sbr.rel (0) target = $region339
    $region338: #{tpu_custom_call.1} parent=1 // pred_region
      %494 = vsyncadd [#allocation2], 16
    $region339: #{tpu_custom_call.1} parent=1 // pred_fallthru
      _
    %s495 = sadd.s32 %s34, 11
    %s496 = sld [smem:[#allocation4 + %s495]]
    %p497 = scmp.gt.s32.totalorder %s496, 0
    %s498 = scalar_select %p497, %s496, 0
    %p499 = scmp.lt.s32.totalorder %s498, 49
    %s500 = scalar_select %p499, %s498, 49
    %s501 = scalar_lea.vmem [#allocation5], %s500
    %s502 = scalar_lea.vmem [#allocation8], 11
    // Predicated region
    $region340: #{tpu_custom_call.1} parent=1 // pred_check
      _
    $region341: #{tpu_custom_call.1} parent=1 // pred_check_branch
      %504 = sbr.rel target = $region343
    $region342: #{tpu_custom_call.1} parent=1 // pred_region
      // Predicated region
      $region355: #{tpu_custom_call.1} parent=342 // pred_check
        _
      $region356: #{tpu_custom_call.1} parent=342 // pred_check_branch
        %520 = sbr.rel (0) target = $region358
      $region357: #{tpu_custom_call.1} parent=342 // pred_region
        %s522 = ssub.s32 2, 1
        loop: start=0, step=1, limit=1
        $region359: #{tpu_custom_call.1} parent=357 // loop_pre_header
          _
        $region360: #{tpu_custom_call.1} parent=357 // loop_header
          %s524 = sphi 0, %s528
          %p525 = scmp.ge.s32.totalorder %s524, 1
          %s529 = sphi %s501, %s501
          %s530 = sphi %s502, %s502
        $region361: #{tpu_custom_call.1} parent=357 // loop_header_branch
          %527 = sbr.rel (%p525) target = $region365
        $region362: #{tpu_custom_call.1} parent=357 // loop_body
          %v531 = vld [vmem:[%s529] sm:%s522]
          %532 = vst [vmem:[%s530] sm:%s522] %v531
        $region363: #{tpu_custom_call.1} parent=357 // loop_footer
          %s528 = sadd.s32 1, %s524
        $region364: #{tpu_custom_call.1} parent=357 // loop_footer_branch
          %523 = sbr.rel target = $region360
        $region365: #{tpu_custom_call.1} parent=357 // loop_exit
          _
      $region358: #{tpu_custom_call.1} parent=342 // pred_fallthru
        _
    $region343: #{tpu_custom_call.1} parent=1 // pred_fallthru
      _
    // Predicated region
    $region344: #{tpu_custom_call.1} parent=1 // pred_check
      _
    $region345: #{tpu_custom_call.1} parent=1 // pred_check_branch
      %506 = sbr.rel (0) target = $region347
    $region346: #{tpu_custom_call.1} parent=1 // pred_region
      %s508 = ssub.s32 2, 1
      loop: start=0, step=1, limit=1
      $region348: #{tpu_custom_call.1} parent=346 // loop_pre_header
        _
      $region349: #{tpu_custom_call.1} parent=346 // loop_header
        %s510 = sphi 0, %s514
        %p511 = scmp.ge.s32.totalorder %s510, 1
        %s515 = sphi %s501, %s501
        %s516 = sphi %s502, %s502
      $region350: #{tpu_custom_call.1} parent=346 // loop_header_branch
        %513 = sbr.rel (%p511) target = $region354
      $region351: #{tpu_custom_call.1} parent=346 // loop_body
        %v517 = vld [vmem:[%s515] sm:%s508]
        %518 = vst [vmem:[%s516] sm:%s508] %v517
      $region352: #{tpu_custom_call.1} parent=346 // loop_footer
        %s514 = sadd.s32 1, %s510
      $region353: #{tpu_custom_call.1} parent=346 // loop_footer_branch
        %509 = sbr.rel target = $region349
      $region354: #{tpu_custom_call.1} parent=346 // loop_exit
        _
    $region347: #{tpu_custom_call.1} parent=1 // pred_fallthru
      _
    // Predicated region
    $region366: #{tpu_custom_call.1} parent=1 // pred_check
      _
    $region367: #{tpu_custom_call.1} parent=1 // pred_check_branch
      %535 = sbr.rel (0) target = $region369
    $region368: #{tpu_custom_call.1} parent=1 // pred_region
      %536 = vsyncadd [#allocation2], 16
    $region369: #{tpu_custom_call.1} parent=1 // pred_fallthru
      _
    %s537 = sadd.s32 %s34, 12
    %s538 = sld [smem:[#allocation4 + %s537]]
    %p539 = scmp.gt.s32.totalorder %s538, 0
    %s540 = scalar_select %p539, %s538, 0
    %p541 = scmp.lt.s32.totalorder %s540, 49
    %s542 = scalar_select %p541, %s540, 49
    %s543 = scalar_lea.vmem [#allocation5], %s542
    %s544 = scalar_lea.vmem [#allocation8], 12
    // Predicated region
    $region370: #{tpu_custom_call.1} parent=1 // pred_check
      _
    $region371: #{tpu_custom_call.1} parent=1 // pred_check_branch
      %546 = sbr.rel target = $region373
    $region372: #{tpu_custom_call.1} parent=1 // pred_region
      // Predicated region
      $region385: #{tpu_custom_call.1} parent=372 // pred_check
        _
      $region386: #{tpu_custom_call.1} parent=372 // pred_check_branch
        %562 = sbr.rel (0) target = $region388
      $region387: #{tpu_custom_call.1} parent=372 // pred_region
        %s564 = ssub.s32 2, 1
        loop: start=0, step=1, limit=1
        $region389: #{tpu_custom_call.1} parent=387 // loop_pre_header
          _
        $region390: #{tpu_custom_call.1} parent=387 // loop_header
          %s566 = sphi 0, %s570
          %p567 = scmp.ge.s32.totalorder %s566, 1
          %s571 = sphi %s543, %s543
          %s572 = sphi %s544, %s544
        $region391: #{tpu_custom_call.1} parent=387 // loop_header_branch
          %569 = sbr.rel (%p567) target = $region395
        $region392: #{tpu_custom_call.1} parent=387 // loop_body
          %v573 = vld [vmem:[%s571] sm:%s564]
          %574 = vst [vmem:[%s572] sm:%s564] %v573
        $region393: #{tpu_custom_call.1} parent=387 // loop_footer
          %s570 = sadd.s32 1, %s566
        $region394: #{tpu_custom_call.1} parent=387 // loop_footer_branch
          %565 = sbr.rel target = $region390
        $region395: #{tpu_custom_call.1} parent=387 // loop_exit
          _
      $region388: #{tpu_custom_call.1} parent=372 // pred_fallthru
        _
    $region373: #{tpu_custom_call.1} parent=1 // pred_fallthru
      _
    // Predicated region
    $region374: #{tpu_custom_call.1} parent=1 // pred_check
      _
    $region375: #{tpu_custom_call.1} parent=1 // pred_check_branch
      %548 = sbr.rel (0) target = $region377
    $region376: #{tpu_custom_call.1} parent=1 // pred_region
      %s550 = ssub.s32 2, 1
      loop: start=0, step=1, limit=1
      $region378: #{tpu_custom_call.1} parent=376 // loop_pre_header
        _
      $region379: #{tpu_custom_call.1} parent=376 // loop_header
        %s552 = sphi 0, %s556
        %p553 = scmp.ge.s32.totalorder %s552, 1
        %s557 = sphi %s543, %s543
        %s558 = sphi %s544, %s544
      $region380: #{tpu_custom_call.1} parent=376 // loop_header_branch
        %555 = sbr.rel (%p553) target = $region384
      $region381: #{tpu_custom_call.1} parent=376 // loop_body
        %v559 = vld [vmem:[%s557] sm:%s550]
        %560 = vst [vmem:[%s558] sm:%s550] %v559
      $region382: #{tpu_custom_call.1} parent=376 // loop_footer
        %s556 = sadd.s32 1, %s552
      $region383: #{tpu_custom_call.1} parent=376 // loop_footer_branch
        %551 = sbr.rel target = $region379
      $region384: #{tpu_custom_call.1} parent=376 // loop_exit
        _
    $region377: #{tpu_custom_call.1} parent=1 // pred_fallthru
      _
    // Predicated region
    $region396: #{tpu_custom_call.1} parent=1 // pred_check
      _
    $region397: #{tpu_custom_call.1} parent=1 // pred_check_branch
      %577 = sbr.rel (0) target = $region399
    $region398: #{tpu_custom_call.1} parent=1 // pred_region
      %578 = vsyncadd [#allocation2], 16
    $region399: #{tpu_custom_call.1} parent=1 // pred_fallthru
      _
    %s579 = sadd.s32 %s34, 13
    %s580 = sld [smem:[#allocation4 + %s579]]
    %p581 = scmp.gt.s32.totalorder %s580, 0
    %s582 = scalar_select %p581, %s580, 0
    %p583 = scmp.lt.s32.totalorder %s582, 49
    %s584 = scalar_select %p583, %s582, 49
    %s585 = scalar_lea.vmem [#allocation5], %s584
    %s586 = scalar_lea.vmem [#allocation8], 13
    // Predicated region
    $region400: #{tpu_custom_call.1} parent=1 // pred_check
      _
    $region401: #{tpu_custom_call.1} parent=1 // pred_check_branch
      %588 = sbr.rel target = $region403
    $region402: #{tpu_custom_call.1} parent=1 // pred_region
      // Predicated region
      $region415: #{tpu_custom_call.1} parent=402 // pred_check
        _
      $region416: #{tpu_custom_call.1} parent=402 // pred_check_branch
        %604 = sbr.rel (0) target = $region418
      $region417: #{tpu_custom_call.1} parent=402 // pred_region
        %s606 = ssub.s32 2, 1
        loop: start=0, step=1, limit=1
        $region419: #{tpu_custom_call.1} parent=417 // loop_pre_header
          _
        $region420: #{tpu_custom_call.1} parent=417 // loop_header
          %s608 = sphi 0, %s612
          %p609 = scmp.ge.s32.totalorder %s608, 1
          %s613 = sphi %s585, %s585
          %s614 = sphi %s586, %s586
        $region421: #{tpu_custom_call.1} parent=417 // loop_header_branch
          %611 = sbr.rel (%p609) target = $region425
        $region422: #{tpu_custom_call.1} parent=417 // loop_body
          %v615 = vld [vmem:[%s613] sm:%s606]
          %616 = vst [vmem:[%s614] sm:%s606] %v615
        $region423: #{tpu_custom_call.1} parent=417 // loop_footer
          %s612 = sadd.s32 1, %s608
        $region424: #{tpu_custom_call.1} parent=417 // loop_footer_branch
          %607 = sbr.rel target = $region420
        $region425: #{tpu_custom_call.1} parent=417 // loop_exit
          _
      $region418: #{tpu_custom_call.1} parent=402 // pred_fallthru
        _
    $region403: #{tpu_custom_call.1} parent=1 // pred_fallthru
      _
    // Predicated region
    $region404: #{tpu_custom_call.1} parent=1 // pred_check
      _
    $region405: #{tpu_custom_call.1} parent=1 // pred_check_branch
      %590 = sbr.rel (0) target = $region407
    $region406: #{tpu_custom_call.1} parent=1 // pred_region
      %s592 = ssub.s32 2, 1
      loop: start=0, step=1, limit=1
      $region408: #{tpu_custom_call.1} parent=406 // loop_pre_header
        _
      $region409: #{tpu_custom_call.1} parent=406 // loop_header
        %s594 = sphi 0, %s598
        %p595 = scmp.ge.s32.totalorder %s594, 1
        %s599 = sphi %s585, %s585
        %s600 = sphi %s586, %s586
      $region410: #{tpu_custom_call.1} parent=406 // loop_header_branch
        %597 = sbr.rel (%p595) target = $region414
      $region411: #{tpu_custom_call.1} parent=406 // loop_body
        %v601 = vld [vmem:[%s599] sm:%s592]
        %602 = vst [vmem:[%s600] sm:%s592] %v601
      $region412: #{tpu_custom_call.1} parent=406 // loop_footer
        %s598 = sadd.s32 1, %s594
      $region413: #{tpu_custom_call.1} parent=406 // loop_footer_branch
        %593 = sbr.rel target = $region409
      $region414: #{tpu_custom_call.1} parent=406 // loop_exit
        _
    $region407: #{tpu_custom_call.1} parent=1 // pred_fallthru
      _
    // Predicated region
    $region426: #{tpu_custom_call.1} parent=1 // pred_check
      _
    $region427: #{tpu_custom_call.1} parent=1 // pred_check_branch
      %619 = sbr.rel (0) target = $region429
    $region428: #{tpu_custom_call.1} parent=1 // pred_region
      %620 = vsyncadd [#allocation2], 16
    $region429: #{tpu_custom_call.1} parent=1 // pred_fallthru
      _
    %s621 = sadd.s32 %s34, 14
    %s622 = sld [smem:[#allocation4 + %s621]]
    %p623 = scmp.gt.s32.totalorder %s622, 0
    %s624 = scalar_select %p623, %s622, 0
    %p625 = scmp.lt.s32.totalorder %s624, 49
    %s626 = scalar_select %p625, %s624, 49
    %s627 = scalar_lea.vmem [#allocation5], %s626
    %s628 = scalar_lea.vmem [#allocation8], 14
    // Predicated region
    $region430: #{tpu_custom_call.1} parent=1 // pred_check
      _
    $region431: #{tpu_custom_call.1} parent=1 // pred_check_branch
      %630 = sbr.rel target = $region433
    $region432: #{tpu_custom_call.1} parent=1 // pred_region
      // Predicated region
      $region445: #{tpu_custom_call.1} parent=432 // pred_check
        _
      $region446: #{tpu_custom_call.1} parent=432 // pred_check_branch
        %646 = sbr.rel (0) target = $region448
      $region447: #{tpu_custom_call.1} parent=432 // pred_region
        %s648 = ssub.s32 2, 1
        loop: start=0, step=1, limit=1
        $region449: #{tpu_custom_call.1} parent=447 // loop_pre_header
          _
        $region450: #{tpu_custom_call.1} parent=447 // loop_header
          %s650 = sphi 0, %s654
          %p651 = scmp.ge.s32.totalorder %s650, 1
          %s655 = sphi %s627, %s627
          %s656 = sphi %s628, %s628
        $region451: #{tpu_custom_call.1} parent=447 // loop_header_branch
          %653 = sbr.rel (%p651) target = $region455
        $region452: #{tpu_custom_call.1} parent=447 // loop_body
          %v657 = vld [vmem:[%s655] sm:%s648]
          %658 = vst [vmem:[%s656] sm:%s648] %v657
        $region453: #{tpu_custom_call.1} parent=447 // loop_footer
          %s654 = sadd.s32 1, %s650
        $region454: #{tpu_custom_call.1} parent=447 // loop_footer_branch
          %649 = sbr.rel target = $region450
        $region455: #{tpu_custom_call.1} parent=447 // loop_exit
          _
      $region448: #{tpu_custom_call.1} parent=432 // pred_fallthru
        _
    $region433: #{tpu_custom_call.1} parent=1 // pred_fallthru
      _
    // Predicated region
    $region434: #{tpu_custom_call.1} parent=1 // pred_check
      _
    $region435: #{tpu_custom_call.1} parent=1 // pred_check_branch
      %632 = sbr.rel (0) target = $region437
    $region436: #{tpu_custom_call.1} parent=1 // pred_region
      %s634 = ssub.s32 2, 1
      loop: start=0, step=1, limit=1
      $region438: #{tpu_custom_call.1} parent=436 // loop_pre_header
        _
      $region439: #{tpu_custom_call.1} parent=436 // loop_header
        %s636 = sphi 0, %s640
        %p637 = scmp.ge.s32.totalorder %s636, 1
        %s641 = sphi %s627, %s627
        %s642 = sphi %s628, %s628
      $region440: #{tpu_custom_call.1} parent=436 // loop_header_branch
        %639 = sbr.rel (%p637) target = $region444
      $region441: #{tpu_custom_call.1} parent=436 // loop_body
        %v643 = vld [vmem:[%s641] sm:%s634]
        %644 = vst [vmem:[%s642] sm:%s634] %v643
      $region442: #{tpu_custom_call.1} parent=436 // loop_footer
        %s640 = sadd.s32 1, %s636
      $region443: #{tpu_custom_call.1} parent=436 // loop_footer_branch
        %635 = sbr.rel target = $region439
      $region444: #{tpu_custom_call.1} parent=436 // loop_exit
        _
    $region437: #{tpu_custom_call.1} parent=1 // pred_fallthru
      _
    // Predicated region
    $region456: #{tpu_custom_call.1} parent=1 // pred_check
      _
    $region457: #{tpu_custom_call.1} parent=1 // pred_check_branch
      %661 = sbr.rel (0) target = $region459
    $region458: #{tpu_custom_call.1} parent=1 // pred_region
      %662 = vsyncadd [#allocation2], 16
    $region459: #{tpu_custom_call.1} parent=1 // pred_fallthru
      _
    %s663 = sadd.s32 %s34, 15
    %s664 = sld [smem:[#allocation4 + %s663]]
    %p665 = scmp.gt.s32.totalorder %s664, 0
    %s666 = scalar_select %p665, %s664, 0
    %p667 = scmp.lt.s32.totalorder %s666, 49
    %s668 = scalar_select %p667, %s666, 49
    %s669 = scalar_lea.vmem [#allocation5], %s668
    %s670 = scalar_lea.vmem [#allocation8], 15
    // Predicated region
    $region460: #{tpu_custom_call.1} parent=1 // pred_check
      _
    $region461: #{tpu_custom_call.1} parent=1 // pred_check_branch
      %672 = sbr.rel target = $region463
    $region462: #{tpu_custom_call.1} parent=1 // pred_region
      // Predicated region
      $region475: #{tpu_custom_call.1} parent=462 // pred_check
        _
      $region476: #{tpu_custom_call.1} parent=462 // pred_check_branch
        %688 = sbr.rel (0) target = $region478
      $region477: #{tpu_custom_call.1} parent=462 // pred_region
        %s690 = ssub.s32 2, 1
        loop: start=0, step=1, limit=1
        $region479: #{tpu_custom_call.1} parent=477 // loop_pre_header
          _
        $region480: #{tpu_custom_call.1} parent=477 // loop_header
          %s692 = sphi 0, %s696
          %p693 = scmp.ge.s32.totalorder %s692, 1
          %s697 = sphi %s669, %s669
          %s698 = sphi %s670, %s670
        $region481: #{tpu_custom_call.1} parent=477 // loop_header_branch
          %695 = sbr.rel (%p693) target = $region485
        $region482: #{tpu_custom_call.1} parent=477 // loop_body
          %v699 = vld [vmem:[%s697] sm:%s690]
          %700 = vst [vmem:[%s698] sm:%s690] %v699
        $region483: #{tpu_custom_call.1} parent=477 // loop_footer
          %s696 = sadd.s32 1, %s692
        $region484: #{tpu_custom_call.1} parent=477 // loop_footer_branch
          %691 = sbr.rel target = $region480
        $region485: #{tpu_custom_call.1} parent=477 // loop_exit
          _
      $region478: #{tpu_custom_call.1} parent=462 // pred_fallthru
        _
    $region463: #{tpu_custom_call.1} parent=1 // pred_fallthru
      _
    // Predicated region
    $region464: #{tpu_custom_call.1} parent=1 // pred_check
      _
    $region465: #{tpu_custom_call.1} parent=1 // pred_check_branch
      %674 = sbr.rel (0) target = $region467
    $region466: #{tpu_custom_call.1} parent=1 // pred_region
      %s676 = ssub.s32 2, 1
      loop: start=0, step=1, limit=1
      $region468: #{tpu_custom_call.1} parent=466 // loop_pre_header
        _
      $region469: #{tpu_custom_call.1} parent=466 // loop_header
        %s678 = sphi 0, %s682
        %p679 = scmp.ge.s32.totalorder %s678, 1
        %s683 = sphi %s669, %s669
        %s684 = sphi %s670, %s670
      $region470: #{tpu_custom_call.1} parent=466 // loop_header_branch
        %681 = sbr.rel (%p679) target = $region474
      $region471: #{tpu_custom_call.1} parent=466 // loop_body
        %v685 = vld [vmem:[%s683] sm:%s676]
        %686 = vst [vmem:[%s684] sm:%s676] %v685
      $region472: #{tpu_custom_call.1} parent=466 // loop_footer
        %s682 = sadd.s32 1, %s678
      $region473: #{tpu_custom_call.1} parent=466 // loop_footer_branch
        %677 = sbr.rel target = $region469
      $region474: #{tpu_custom_call.1} parent=466 // loop_exit
        _
    $region467: #{tpu_custom_call.1} parent=1 // pred_fallthru
      _
    // Predicated region
    $region486: #{tpu_custom_call.1} parent=1 // pred_check
      _
    $region487: #{tpu_custom_call.1} parent=1 // pred_check_branch
      %703 = sbr.rel (0) target = $region489
    $region488: #{tpu_custom_call.1} parent=1 // pred_region
      %704 = vsyncadd [#allocation2], 16
    $region489: #{tpu_custom_call.1} parent=1 // pred_fallthru
      _
    %s705 = smul.u32 16, 1
    %s706 = sshll.u32 %s705, 4
    %707 = dma.done [#allocation2], %s706
    // Predicated region
    $region490: #{tpu_custom_call.1} parent=1 // pred_check
      _
    $region491: #{tpu_custom_call.1} parent=1 // pred_check_branch
      %709 = sbr.rel (0) target = $region493
    $region492: #{tpu_custom_call.1} parent=1 // pred_region
      %711 = vsyncadd [#allocation7], 0
      %s712 = sshll.u32 [#allocation8], 4
      %s713 = int_to_ptr.vmem [resolvable:$true] %s712
      %s714 = sshll.u32 %s2, 4
      %s715 = int_to_ptr.hbm [resolvable:$true] %s714
      %720 = dma.vmem_to_hbm [thread:$0]  %s713, 256, %s715, [#allocation7], 128, 128, 8
    $region493: #{tpu_custom_call.1} parent=1 // pred_fallthru
      _
    // Predicated region
    $region494: #{tpu_custom_call.1} parent=1 // pred_check
      _
    $region495: #{tpu_custom_call.1} parent=1 // pred_check_branch
      %722 = sbr.rel (0) target = $region497
    $region496: #{tpu_custom_call.1} parent=1 // pred_region
      %724 = dma.done [#allocation7], 256
    $region497: #{tpu_custom_call.1} parent=1 // pred_fallthru
      _
    %725 = vsyncpa [#allocation6], 1
    %726 = vsyncpa [#allocation7], 1
  %727 = vsyncmov [#allocation2]
  %s728 = vpop.sfrf %727
  %p729 = scmp.eq.s32.totalorder %s728, 0
  %p730 = pneg %p729
  %732 = shalt.err (%p730)

</llo_original>
